<compile_context>
chip_gen: v6e
topology: v6e:2x2x1
jax: 0.10.0
libtpu: 0.0.40
codegen_flags: <defaults>
</compile_context>

<pallas_src>
import jax
import jax.numpy as jnp
from jax.experimental import pallas as pl
from jax.experimental.pallas import tpu as pltpu

K = 7                 # conv kernel size
PAD = (K - 1) // 2    # same-padding


def attention_gate(x, conv_w, bn_gamma, bn_beta, bn_mean, bn_var, eps=1e-5):
    """x: (N, C, H, W); conv_w: (1, 2, K, K). Returns x * sigmoid(BN(conv(ZPool(x))))."""
    N, C, H, W = x.shape
    HW = H * W
    HWp = ((HW + 127) // 128) * 128            # lane-dense spatial length
    itemsize = jnp.dtype(x.dtype).itemsize

    # ---- fold eval-mode BatchNorm into the bias-free conv ---------------------------
    s = bn_gamma / jnp.sqrt(bn_var + eps)                          # (1,)
    w_folded = (conv_w * s[:, None, None, None]).reshape(-1)       # (2*K*K,)
    w_folded = w_folded.astype(jnp.float32)
    b_folded = (bn_beta - bn_mean * s).astype(jnp.float32)         # (1,)

    # ---- lane-dense layout: (N, C*HWp), spatial tail zero-padded to 128 lanes --------
    xf = x.reshape(N, C, HW)
    if HWp != HW:
        # Zero tail => pooled maps are exactly 0 there, which doubles as the
        # "row >= H" halo for the conv taps that land in [HW, HWp).
        # TODO(synk): this pad is one extra HBM pass; fuse with the producer if hot.
        xf = jnp.pad(xf, ((0, 0), (0, 0), (0, HWp - HW)))
    xf = xf.reshape(N, C * HWp)

    # ---- column-validity masks for the 7 kw offsets (host-side, tiny) ---------------
    col = jnp.arange(HW, dtype=jnp.int32) % W                      # (HW,)
    kw_off = jnp.arange(K, dtype=jnp.int32)[:, None] - PAD         # (K, 1)
    shifted = col[None, :] + kw_off                                # (K, HW)
    cmask = ((shifted >= 0) & (shifted < W)).astype(jnp.float32)   # (K, HW)
    if HWp != HW:
        cmask = jnp.pad(cmask, ((0, 0), (0, HWp - HW)))            # (K, HWp)

    # ---- block sizing: ~2 MiB of input per grid step, sublane-dense NB ---------------
    row_bytes = C * HWp * itemsize
    TARGET = 2 << 20
    NB = max(1, min(TARGET // row_bytes, N))
    if pl.cdiv(N, NB) < 2 and N > 8:
        NB = pl.cdiv(N, 2)               # keep >= 2 grid steps so both v7x TCs get work
    NB = max(8, (NB // 8) * 8)           # multiple of 8 -> dense sublane tiles
    G = pl.cdiv(N, NB)
    Np = G * NB
    if Np != N:
        xf = jnp.pad(xf, ((0, Np - N), (0, 0)))    # zero rows; sliced off below

    block_bytes = NB * row_bytes
    interm_bytes = 12 * NB * HWp * 4               # pooled maps / acc / scale (f32)
    vmem_limit = int(min(64 << 20,
                         max(32 << 20, 4 * block_bytes + interm_bytes + (2 << 20))))

    # lane-aligned zero padding for the flattened pooled maps (covers the 3-row halo)
    PADF = ((PAD * W + PAD + 127) // 128) * 128
    OFF = PADF - (PAD * W + PAD)

    def kernel(w_ref, b_ref, cmask_ref, x_ref, o_ref):
        # w_ref: SMEM (2*K*K,) folded conv weights; b_ref: SMEM (1,) folded bias
        # cmask_ref: VMEM (K, HWp) column-validity masks
        # x_ref / o_ref: VMEM (NB, C*HWp), channel c lives in lanes [c*HWp, (c+1)*HWp)

        # --- ZPool: channel max (native dtype, exact) / mean (f32 accumulation) ------
        cmax = x_ref[:, 0:HWp]
        csum = cmax.astype(jnp.float32)
        for c in range(1, C):
            xc = x_ref[:, c * HWp:(c + 1) * HWp]       # aligned lane slice
            cmax = jnp.maximum(cmax, xc)
            csum = csum + xc.astype(jnp.float32)
        cmaxf = cmax.astype(jnp.float32)               # (NB, HWp)
        cmeanf = csum * (1.0 / C)                      # (NB, HWp)

        # --- zero-pad the flat maps in registers (handles row out-of-range taps) -----
        zpad = jnp.zeros((NB, PADF), jnp.float32)
        pmax = jnp.concatenate([zpad, cmaxf, zpad], axis=1)    # (NB, HWp + 2*PADF)
        pmean = jnp.concatenate([zpad, cmeanf, zpad], axis=1)

        # --- 7x7 conv (2 in-ch -> 1 out-ch) on the flat layout ------------------------
        # tap (kh, kw) at output p reads padded_flat[p + OFF + kh*W + kw]; column
        # validity (j + kw - PAD in [0, W)) is applied once per kw via a float mask.
        acc = jnp.full((NB, HWp), b_ref[0], jnp.float32)
        for kw in range(K):
            inner = jnp.zeros((NB, HWp), jnp.float32)
            for kh in range(K):
                s0 = OFF + kh * W + kw
                inner = inner + w_ref[0 * K * K + kh * K + kw] * pmax[:, s0:s0 + HWp]
                inner = inner + w_ref[1 * K * K + kh * K + kw] * pmean[:, s0:s0 + HWp]
            if kw == PAD:
                acc = acc + inner                      # centre column: always valid
            else:
                acc = acc + cmask_ref[kw:kw + 1, :] * inner

        # --- sigmoid gate (exp on EUP), applied per channel slice (no broadcasts) -----
        scale = 1.0 / (1.0 + jnp.exp(-acc))            # (NB, HWp) f32, exact
        for c in range(C):
            sl = slice(c * HWp, (c + 1) * HWp)
            o_ref[:, sl] = (x_ref[:, sl] * scale).astype(o_ref.dtype)

    cost = pl.CostEstimate(
        flops=int(Np * HWp * (3 * C + 4 * K * K + 10)),
        transcendentals=int(Np * HWp),
        bytes_accessed=int(2 * Np * C * HWp * itemsize),
    )

    out_flat = pl.pallas_call(
        kernel,
        out_shape=jax.ShapeDtypeStruct((Np, C * HWp), x.dtype),
        grid_spec=pltpu.PrefetchScalarGridSpec(
            num_scalar_prefetch=0,
            grid=(G,),
            in_specs=[
                pl.BlockSpec(memory_space=pltpu.MemorySpace.SMEM),      # folded weights
                pl.BlockSpec(memory_space=pltpu.MemorySpace.SMEM),      # folded bias
                pl.BlockSpec((K, HWp), lambda n: (0, 0)),               # column masks
                pl.BlockSpec((NB, C * HWp), lambda n: (n, 0)),          # x (lane-dense)
            ],
            out_specs=pl.BlockSpec((NB, C * HWp), lambda n: (n, 0)),
        ),
        compiler_params=pltpu.CompilerParams(
            dimension_semantics=("parallel",),      # batch axis; shards across TCs on v7x
            vmem_limit_bytes=vmem_limit),
        cost_estimate=cost,
    )(w_folded, b_folded, cmask, xf)

    out = out_flat[:N].reshape(N, C, HWp)
    if HWp != HW:
        out = out[:, :, :HW]
    return out.reshape(N, C, H, W)


def attention_gate_reference(x, conv_w, bn_gamma, bn_beta, bn_mean, bn_var, eps=1e-5):
    """Pure-JAX reference mirroring the PyTorch forward (eval-mode BN)."""
    cmax = jnp.max(x, axis=1, keepdims=True)
    cmean = jnp.mean(x, axis=1, keepdims=True)
    xc = jnp.concatenate([cmax, cmean], axis=1)              # (N, 2, H, W)
    y = jax.lax.conv_general_dilated(
        xc, conv_w, window_strides=(1, 1),
        padding=((PAD, PAD), (PAD, PAD)),
        dimension_numbers=("NCHW", "OIHW", "NCHW"))          # (N, 1, H, W)
    g = bn_gamma[None, :, None, None]
    b = bn_beta[None, :, None, None]
    m = bn_mean[None, :, None, None]
    v = bn_var[None, :, None, None]
    y = g * (y - m) / jnp.sqrt(v + eps) + b
    return x * jax.nn.sigmoid(y)


if __name__ == "__main__":
    key = jax.random.PRNGKey(0)
    k_x, k_w = jax.random.split(key)

    N, C, H, W = 2, 4, 16, 16
    x = jax.random.normal(k_x, (N, C, H, W), dtype=jnp.float32)

    # Conv2d(2, 1, 7, bias=False) weight, deterministic kaiming-style uniform init.
    fan_in = 2 * K * K
    bound = 1.0 / (fan_in ** 0.5)
    conv_w = jax.random.uniform(k_w, (1, 2, K, K), jnp.float32, -bound, bound)

    # BatchNorm2d(1) parameters / running stats (fresh-init PyTorch defaults), eval mode.
    bn_gamma = jnp.ones((1,), jnp.float32)
    bn_beta = jnp.zeros((1,), jnp.float32)
    bn_mean = jnp.zeros((1,), jnp.float32)
    bn_var = jnp.ones((1,), jnp.float32)

    out = attention_gate(x, conv_w, bn_gamma, bn_beta, bn_mean, bn_var)
    out = jax.block_until_ready(out)

    ref = attention_gate_reference(x, conv_w, bn_gamma, bn_beta, bn_mean, bn_var)
    assert out.shape == (N, C, H, W)
    assert jnp.allclose(out, ref, atol=1e-5, rtol=1e-5), \
        f"max abs err = {jnp.max(jnp.abs(out - ref))}"

    print("KERNEL_OK")
</pallas_src>

<mosaic_0001>
module attributes {stable_mosaic.version = 11 : i64} {
  func.func @kernel(%arg0: i32, %arg1: memref<98xf32, #tpu.memory_space<smem>>, %arg2: memref<1xf32, #tpu.memory_space<smem>>, %arg3: memref<7x256xf32, #tpu.memory_space<vmem>>, %arg4: memref<8x1024xf32, #tpu.memory_space<vmem>>, %arg5: memref<8x1024xf32, #tpu.memory_space<vmem>>) attributes {dimension_semantics = [#tpu.dimension_semantics<parallel>], iteration_bounds = array<i64: 1>, scalar_prefetch = 0 : i64, scratch_operands = 0 : i64, tpu.core_type = #tpu.core_type<tc>, window_params = [{transform_indices = @transform_0, window_bounds = array<i64: 98>}, {transform_indices = @transform_1, window_bounds = array<i64: 1>}, {pipeline_mode = #tpu.pipeline_mode<synchronous>, transform_indices = @transform_2, window_bounds = array<i64: 7, 256>}, {transform_indices = @transform_3, window_bounds = array<i64: 8, 1024>}, {transform_indices = @transform_4, window_bounds = array<i64: 8, 1024>}]} {
    %c0 = arith.constant 0 : index
    %c0_0 = arith.constant 0 : index
    %0 = vector.load %arg4[%c0, %c0_0] : memref<8x1024xf32, #tpu.memory_space<vmem>>, vector<8x256xf32>
    %c0_1 = arith.constant 0 : index
    %c256 = arith.constant 256 : index
    %1 = vector.load %arg4[%c0_1, %c256] : memref<8x1024xf32, #tpu.memory_space<vmem>>, vector<8x256xf32>
    %2 = arith.maximumf %0, %1 : vector<8x256xf32>
    %3 = arith.addf %0, %1 : vector<8x256xf32>
    %c0_2 = arith.constant 0 : index
    %c512 = arith.constant 512 : index
    %4 = vector.load %arg4[%c0_2, %c512] : memref<8x1024xf32, #tpu.memory_space<vmem>>, vector<8x256xf32>
    %5 = arith.maximumf %2, %4 : vector<8x256xf32>
    %6 = arith.addf %3, %4 : vector<8x256xf32>
    %c0_3 = arith.constant 0 : index
    %c768 = arith.constant 768 : index
    %7 = vector.load %arg4[%c0_3, %c768] : memref<8x1024xf32, #tpu.memory_space<vmem>>, vector<8x256xf32>
    %8 = arith.maximumf %5, %7 : vector<8x256xf32>
    %9 = arith.addf %6, %7 : vector<8x256xf32>
    %cst = arith.constant 2.500000e-01 : f32
    %10 = vector.broadcast %cst : f32 to vector<8x256xf32>
    %11 = arith.mulf %9, %10 : vector<8x256xf32>
    %cst_4 = arith.constant 0.000000e+00 : f32
    %12 = vector.broadcast %cst_4 : f32 to vector<8x128xf32>
    %13 = tpu.concatenate %12, %8, %12 in 1 : vector<8x128xf32>, vector<8x256xf32>, vector<8x128xf32> -> vector<8x512xf32>
    %14 = tpu.concatenate %12, %11, %12 in 1 : vector<8x128xf32>, vector<8x256xf32>, vector<8x128xf32> -> vector<8x512xf32>
    %c0_5 = arith.constant 0 : index
    %15 = memref.load %arg2[%c0_5] : memref<1xf32, #tpu.memory_space<smem>>
    %16 = vector.broadcast %15 : f32 to vector<8x256xf32>
    %cst_6 = arith.constant 0.000000e+00 : f32
    %17 = vector.broadcast %cst_6 : f32 to vector<8x256xf32>
    %c0_7 = arith.constant 0 : index
    %18 = memref.load %arg1[%c0_7] : memref<98xf32, #tpu.memory_space<smem>>
    %19 = vector.extract_strided_slice %13 {offsets = [0, 77], sizes = [8, 256], strides = [1, 1]} : vector<8x512xf32> to vector<8x256xf32>
    %20 = vector.broadcast %18 : f32 to vector<8x256xf32>
    %21 = arith.mulf %20, %19 : vector<8x256xf32>
    %22 = arith.addf %17, %21 : vector<8x256xf32>
    %c49 = arith.constant 49 : index
    %23 = memref.load %arg1[%c49] : memref<98xf32, #tpu.memory_space<smem>>
    %24 = vector.extract_strided_slice %14 {offsets = [0, 77], sizes = [8, 256], strides = [1, 1]} : vector<8x512xf32> to vector<8x256xf32>
    %25 = vector.broadcast %23 : f32 to vector<8x256xf32>
    %26 = arith.mulf %25, %24 : vector<8x256xf32>
    %27 = arith.addf %22, %26 : vector<8x256xf32>
    %c7 = arith.constant 7 : index
    %28 = memref.load %arg1[%c7] : memref<98xf32, #tpu.memory_space<smem>>
    %29 = vector.extract_strided_slice %13 {offsets = [0, 93], sizes = [8, 256], strides = [1, 1]} : vector<8x512xf32> to vector<8x256xf32>
    %30 = vector.broadcast %28 : f32 to vector<8x256xf32>
    %31 = arith.mulf %30, %29 : vector<8x256xf32>
    %32 = arith.addf %27, %31 : vector<8x256xf32>
    %c56 = arith.constant 56 : index
    %33 = memref.load %arg1[%c56] : memref<98xf32, #tpu.memory_space<smem>>
    %34 = vector.extract_strided_slice %14 {offsets = [0, 93], sizes = [8, 256], strides = [1, 1]} : vector<8x512xf32> to vector<8x256xf32>
    %35 = vector.broadcast %33 : f32 to vector<8x256xf32>
    %36 = arith.mulf %35, %34 : vector<8x256xf32>
    %37 = arith.addf %32, %36 : vector<8x256xf32>
    %c14 = arith.constant 14 : index
    %38 = memref.load %arg1[%c14] : memref<98xf32, #tpu.memory_space<smem>>
    %39 = vector.extract_strided_slice %13 {offsets = [0, 109], sizes = [8, 256], strides = [1, 1]} : vector<8x512xf32> to vector<8x256xf32>
    %40 = vector.broadcast %38 : f32 to vector<8x256xf32>
    %41 = arith.mulf %40, %39 : vector<8x256xf32>
    %42 = arith.addf %37, %41 : vector<8x256xf32>
    %c63 = arith.constant 63 : index
    %43 = memref.load %arg1[%c63] : memref<98xf32, #tpu.memory_space<smem>>
    %44 = vector.extract_strided_slice %14 {offsets = [0, 109], sizes = [8, 256], strides = [1, 1]} : vector<8x512xf32> to vector<8x256xf32>
    %45 = vector.broadcast %43 : f32 to vector<8x256xf32>
    %46 = arith.mulf %45, %44 : vector<8x256xf32>
    %47 = arith.addf %42, %46 : vector<8x256xf32>
    %c21 = arith.constant 21 : index
    %48 = memref.load %arg1[%c21] : memref<98xf32, #tpu.memory_space<smem>>
    %49 = vector.extract_strided_slice %13 {offsets = [0, 125], sizes = [8, 256], strides = [1, 1]} : vector<8x512xf32> to vector<8x256xf32>
    %50 = vector.broadcast %48 : f32 to vector<8x256xf32>
    %51 = arith.mulf %50, %49 : vector<8x256xf32>
    %52 = arith.addf %47, %51 : vector<8x256xf32>
    %c70 = arith.constant 70 : index
    %53 = memref.load %arg1[%c70] : memref<98xf32, #tpu.memory_space<smem>>
    %54 = vector.extract_strided_slice %14 {offsets = [0, 125], sizes = [8, 256], strides = [1, 1]} : vector<8x512xf32> to vector<8x256xf32>
    %55 = vector.broadcast %53 : f32 to vector<8x256xf32>
    %56 = arith.mulf %55, %54 : vector<8x256xf32>
    %57 = arith.addf %52, %56 : vector<8x256xf32>
    %c28 = arith.constant 28 : index
    %58 = memref.load %arg1[%c28] : memref<98xf32, #tpu.memory_space<smem>>
    %59 = vector.extract_strided_slice %13 {offsets = [0, 141], sizes = [8, 256], strides = [1, 1]} : vector<8x512xf32> to vector<8x256xf32>
    %60 = vector.broadcast %58 : f32 to vector<8x256xf32>
    %61 = arith.mulf %60, %59 : vector<8x256xf32>
    %62 = arith.addf %57, %61 : vector<8x256xf32>
    %c77 = arith.constant 77 : index
    %63 = memref.load %arg1[%c77] : memref<98xf32, #tpu.memory_space<smem>>
    %64 = vector.extract_strided_slice %14 {offsets = [0, 141], sizes = [8, 256], strides = [1, 1]} : vector<8x512xf32> to vector<8x256xf32>
    %65 = vector.broadcast %63 : f32 to vector<8x256xf32>
    %66 = arith.mulf %65, %64 : vector<8x256xf32>
    %67 = arith.addf %62, %66 : vector<8x256xf32>
    %c35 = arith.constant 35 : index
    %68 = memref.load %arg1[%c35] : memref<98xf32, #tpu.memory_space<smem>>
    %69 = vector.extract_strided_slice %13 {offsets = [0, 157], sizes = [8, 256], strides = [1, 1]} : vector<8x512xf32> to vector<8x256xf32>
    %70 = vector.broadcast %68 : f32 to vector<8x256xf32>
    %71 = arith.mulf %70, %69 : vector<8x256xf32>
    %72 = arith.addf %67, %71 : vector<8x256xf32>
    %c84 = arith.constant 84 : index
    %73 = memref.load %arg1[%c84] : memref<98xf32, #tpu.memory_space<smem>>
    %74 = vector.extract_strided_slice %14 {offsets = [0, 157], sizes = [8, 256], strides = [1, 1]} : vector<8x512xf32> to vector<8x256xf32>
    %75 = vector.broadcast %73 : f32 to vector<8x256xf32>
    %76 = arith.mulf %75, %74 : vector<8x256xf32>
    %77 = arith.addf %72, %76 : vector<8x256xf32>
    %c42 = arith.constant 42 : index
    %78 = memref.load %arg1[%c42] : memref<98xf32, #tpu.memory_space<smem>>
    %79 = vector.extract_strided_slice %13 {offsets = [0, 173], sizes = [8, 256], strides = [1, 1]} : vector<8x512xf32> to vector<8x256xf32>
    %80 = vector.broadcast %78 : f32 to vector<8x256xf32>
    %81 = arith.mulf %80, %79 : vector<8x256xf32>
    %82 = arith.addf %77, %81 : vector<8x256xf32>
    %c91 = arith.constant 91 : index
    %83 = memref.load %arg1[%c91] : memref<98xf32, #tpu.memory_space<smem>>
    %84 = vector.extract_strided_slice %14 {offsets = [0, 173], sizes = [8, 256], strides = [1, 1]} : vector<8x512xf32> to vector<8x256xf32>
    %85 = vector.broadcast %83 : f32 to vector<8x256xf32>
    %86 = arith.mulf %85, %84 : vector<8x256xf32>
    %87 = arith.addf %82, %86 : vector<8x256xf32>
    %c0_8 = arith.constant 0 : index
    %c0_9 = arith.constant 0 : index
    %88 = vector.load %arg3[%c0_8, %c0_9] : memref<7x256xf32, #tpu.memory_space<vmem>>, vector<1x256xf32>
    %89 = vector.broadcast %88 : vector<1x256xf32> to vector<8x256xf32>
    %90 = arith.mulf %89, %87 : vector<8x256xf32>
    %91 = arith.addf %16, %90 : vector<8x256xf32>
    %cst_10 = arith.constant 0.000000e+00 : f32
    %92 = vector.broadcast %cst_10 : f32 to vector<8x256xf32>
    %c1 = arith.constant 1 : index
    %93 = memref.load %arg1[%c1] : memref<98xf32, #tpu.memory_space<smem>>
    %94 = vector.extract_strided_slice %13 {offsets = [0, 78], sizes = [8, 256], strides = [1, 1]} : vector<8x512xf32> to vector<8x256xf32>
    %95 = vector.broadcast %93 : f32 to vector<8x256xf32>
    %96 = arith.mulf %95, %94 : vector<8x256xf32>
    %97 = arith.addf %92, %96 : vector<8x256xf32>
    %c50 = arith.constant 50 : index
    %98 = memref.load %arg1[%c50] : memref<98xf32, #tpu.memory_space<smem>>
    %99 = vector.extract_strided_slice %14 {offsets = [0, 78], sizes = [8, 256], strides = [1, 1]} : vector<8x512xf32> to vector<8x256xf32>
    %100 = vector.broadcast %98 : f32 to vector<8x256xf32>
    %101 = arith.mulf %100, %99 : vector<8x256xf32>
    %102 = arith.addf %97, %101 : vector<8x256xf32>
    %c8 = arith.constant 8 : index
    %103 = memref.load %arg1[%c8] : memref<98xf32, #tpu.memory_space<smem>>
    %104 = vector.extract_strided_slice %13 {offsets = [0, 94], sizes = [8, 256], strides = [1, 1]} : vector<8x512xf32> to vector<8x256xf32>
    %105 = vector.broadcast %103 : f32 to vector<8x256xf32>
    %106 = arith.mulf %105, %104 : vector<8x256xf32>
    %107 = arith.addf %102, %106 : vector<8x256xf32>
    %c57 = arith.constant 57 : index
    %108 = memref.load %arg1[%c57] : memref<98xf32, #tpu.memory_space<smem>>
    %109 = vector.extract_strided_slice %14 {offsets = [0, 94], sizes = [8, 256], strides = [1, 1]} : vector<8x512xf32> to vector<8x256xf32>
    %110 = vector.broadcast %108 : f32 to vector<8x256xf32>
    %111 = arith.mulf %110, %109 : vector<8x256xf32>
    %112 = arith.addf %107, %111 : vector<8x256xf32>
    %c15 = arith.constant 15 : index
    %113 = memref.load %arg1[%c15] : memref<98xf32, #tpu.memory_space<smem>>
    %114 = vector.extract_strided_slice %13 {offsets = [0, 110], sizes = [8, 256], strides = [1, 1]} : vector<8x512xf32> to vector<8x256xf32>
    %115 = vector.broadcast %113 : f32 to vector<8x256xf32>
    %116 = arith.mulf %115, %114 : vector<8x256xf32>
    %117 = arith.addf %112, %116 : vector<8x256xf32>
    %c64 = arith.constant 64 : index
    %118 = memref.load %arg1[%c64] : memref<98xf32, #tpu.memory_space<smem>>
    %119 = vector.extract_strided_slice %14 {offsets = [0, 110], sizes = [8, 256], strides = [1, 1]} : vector<8x512xf32> to vector<8x256xf32>
    %120 = vector.broadcast %118 : f32 to vector<8x256xf32>
    %121 = arith.mulf %120, %119 : vector<8x256xf32>
    %122 = arith.addf %117, %121 : vector<8x256xf32>
    %c22 = arith.constant 22 : index
    %123 = memref.load %arg1[%c22] : memref<98xf32, #tpu.memory_space<smem>>
    %124 = vector.extract_strided_slice %13 {offsets = [0, 126], sizes = [8, 256], strides = [1, 1]} : vector<8x512xf32> to vector<8x256xf32>
    %125 = vector.broadcast %123 : f32 to vector<8x256xf32>
    %126 = arith.mulf %125, %124 : vector<8x256xf32>
    %127 = arith.addf %122, %126 : vector<8x256xf32>
    %c71 = arith.constant 71 : index
    %128 = memref.load %arg1[%c71] : memref<98xf32, #tpu.memory_space<smem>>
    %129 = vector.extract_strided_slice %14 {offsets = [0, 126], sizes = [8, 256], strides = [1, 1]} : vector<8x512xf32> to vector<8x256xf32>
    %130 = vector.broadcast %128 : f32 to vector<8x256xf32>
    %131 = arith.mulf %130, %129 : vector<8x256xf32>
    %132 = arith.addf %127, %131 : vector<8x256xf32>
    %c29 = arith.constant 29 : index
    %133 = memref.load %arg1[%c29] : memref<98xf32, #tpu.memory_space<smem>>
    %134 = vector.extract_strided_slice %13 {offsets = [0, 142], sizes = [8, 256], strides = [1, 1]} : vector<8x512xf32> to vector<8x256xf32>
    %135 = vector.broadcast %133 : f32 to vector<8x256xf32>
    %136 = arith.mulf %135, %134 : vector<8x256xf32>
    %137 = arith.addf %132, %136 : vector<8x256xf32>
    %c78 = arith.constant 78 : index
    %138 = memref.load %arg1[%c78] : memref<98xf32, #tpu.memory_space<smem>>
    %139 = vector.extract_strided_slice %14 {offsets = [0, 142], sizes = [8, 256], strides = [1, 1]} : vector<8x512xf32> to vector<8x256xf32>
    %140 = vector.broadcast %138 : f32 to vector<8x256xf32>
    %141 = arith.mulf %140, %139 : vector<8x256xf32>
    %142 = arith.addf %137, %141 : vector<8x256xf32>
    %c36 = arith.constant 36 : index
    %143 = memref.load %arg1[%c36] : memref<98xf32, #tpu.memory_space<smem>>
    %144 = vector.extract_strided_slice %13 {offsets = [0, 158], sizes = [8, 256], strides = [1, 1]} : vector<8x512xf32> to vector<8x256xf32>
    %145 = vector.broadcast %143 : f32 to vector<8x256xf32>
    %146 = arith.mulf %145, %144 : vector<8x256xf32>
    %147 = arith.addf %142, %146 : vector<8x256xf32>
    %c85 = arith.constant 85 : index
    %148 = memref.load %arg1[%c85] : memref<98xf32, #tpu.memory_space<smem>>
    %149 = vector.extract_strided_slice %14 {offsets = [0, 158], sizes = [8, 256], strides = [1, 1]} : vector<8x512xf32> to vector<8x256xf32>
    %150 = vector.broadcast %148 : f32 to vector<8x256xf32>
    %151 = arith.mulf %150, %149 : vector<8x256xf32>
    %152 = arith.addf %147, %151 : vector<8x256xf32>
    %c43 = arith.constant 43 : index
    %153 = memref.load %arg1[%c43] : memref<98xf32, #tpu.memory_space<smem>>
    %154 = vector.extract_strided_slice %13 {offsets = [0, 174], sizes = [8, 256], strides = [1, 1]} : vector<8x512xf32> to vector<8x256xf32>
    %155 = vector.broadcast %153 : f32 to vector<8x256xf32>
    %156 = arith.mulf %155, %154 : vector<8x256xf32>
    %157 = arith.addf %152, %156 : vector<8x256xf32>
    %c92 = arith.constant 92 : index
    %158 = memref.load %arg1[%c92] : memref<98xf32, #tpu.memory_space<smem>>
    %159 = vector.extract_strided_slice %14 {offsets = [0, 174], sizes = [8, 256], strides = [1, 1]} : vector<8x512xf32> to vector<8x256xf32>
    %160 = vector.broadcast %158 : f32 to vector<8x256xf32>
    %161 = arith.mulf %160, %159 : vector<8x256xf32>
    %162 = arith.addf %157, %161 : vector<8x256xf32>
    %c1_11 = arith.constant 1 : index
    %c0_12 = arith.constant 0 : index
    %163 = vector.load %arg3[%c1_11, %c0_12] : memref<7x256xf32, #tpu.memory_space<vmem>>, vector<1x256xf32>
    %164 = vector.broadcast %163 : vector<1x256xf32> to vector<8x256xf32>
    %165 = arith.mulf %164, %162 : vector<8x256xf32>
    %166 = arith.addf %91, %165 : vector<8x256xf32>
    %cst_13 = arith.constant 0.000000e+00 : f32
    %167 = vector.broadcast %cst_13 : f32 to vector<8x256xf32>
    %c2 = arith.constant 2 : index
    %168 = memref.load %arg1[%c2] : memref<98xf32, #tpu.memory_space<smem>>
    %169 = vector.extract_strided_slice %13 {offsets = [0, 79], sizes = [8, 256], strides = [1, 1]} : vector<8x512xf32> to vector<8x256xf32>
    %170 = vector.broadcast %168 : f32 to vector<8x256xf32>
    %171 = arith.mulf %170, %169 : vector<8x256xf32>
    %172 = arith.addf %167, %171 : vector<8x256xf32>
    %c51 = arith.constant 51 : index
    %173 = memref.load %arg1[%c51] : memref<98xf32, #tpu.memory_space<smem>>
    %174 = vector.extract_strided_slice %14 {offsets = [0, 79], sizes = [8, 256], strides = [1, 1]} : vector<8x512xf32> to vector<8x256xf32>
    %175 = vector.broadcast %173 : f32 to vector<8x256xf32>
    %176 = arith.mulf %175, %174 : vector<8x256xf32>
    %177 = arith.addf %172, %176 : vector<8x256xf32>
    %c9 = arith.constant 9 : index
    %178 = memref.load %arg1[%c9] : memref<98xf32, #tpu.memory_space<smem>>
    %179 = vector.extract_strided_slice %13 {offsets = [0, 95], sizes = [8, 256], strides = [1, 1]} : vector<8x512xf32> to vector<8x256xf32>
    %180 = vector.broadcast %178 : f32 to vector<8x256xf32>
    %181 = arith.mulf %180, %179 : vector<8x256xf32>
    %182 = arith.addf %177, %181 : vector<8x256xf32>
    %c58 = arith.constant 58 : index
    %183 = memref.load %arg1[%c58] : memref<98xf32, #tpu.memory_space<smem>>
    %184 = vector.extract_strided_slice %14 {offsets = [0, 95], sizes = [8, 256], strides = [1, 1]} : vector<8x512xf32> to vector<8x256xf32>
    %185 = vector.broadcast %183 : f32 to vector<8x256xf32>
    %186 = arith.mulf %185, %184 : vector<8x256xf32>
    %187 = arith.addf %182, %186 : vector<8x256xf32>
    %c16 = arith.constant 16 : index
    %188 = memref.load %arg1[%c16] : memref<98xf32, #tpu.memory_space<smem>>
    %189 = vector.extract_strided_slice %13 {offsets = [0, 111], sizes = [8, 256], strides = [1, 1]} : vector<8x512xf32> to vector<8x256xf32>
    %190 = vector.broadcast %188 : f32 to vector<8x256xf32>
    %191 = arith.mulf %190, %189 : vector<8x256xf32>
    %192 = arith.addf %187, %191 : vector<8x256xf32>
    %c65 = arith.constant 65 : index
    %193 = memref.load %arg1[%c65] : memref<98xf32, #tpu.memory_space<smem>>
    %194 = vector.extract_strided_slice %14 {offsets = [0, 111], sizes = [8, 256], strides = [1, 1]} : vector<8x512xf32> to vector<8x256xf32>
    %195 = vector.broadcast %193 : f32 to vector<8x256xf32>
    %196 = arith.mulf %195, %194 : vector<8x256xf32>
    %197 = arith.addf %192, %196 : vector<8x256xf32>
    %c23 = arith.constant 23 : index
    %198 = memref.load %arg1[%c23] : memref<98xf32, #tpu.memory_space<smem>>
    %199 = vector.extract_strided_slice %13 {offsets = [0, 127], sizes = [8, 256], strides = [1, 1]} : vector<8x512xf32> to vector<8x256xf32>
    %200 = vector.broadcast %198 : f32 to vector<8x256xf32>
    %201 = arith.mulf %200, %199 : vector<8x256xf32>
    %202 = arith.addf %197, %201 : vector<8x256xf32>
    %c72 = arith.constant 72 : index
    %203 = memref.load %arg1[%c72] : memref<98xf32, #tpu.memory_space<smem>>
    %204 = vector.extract_strided_slice %14 {offsets = [0, 127], sizes = [8, 256], strides = [1, 1]} : vector<8x512xf32> to vector<8x256xf32>
    %205 = vector.broadcast %203 : f32 to vector<8x256xf32>
    %206 = arith.mulf %205, %204 : vector<8x256xf32>
    %207 = arith.addf %202, %206 : vector<8x256xf32>
    %c30 = arith.constant 30 : index
    %208 = memref.load %arg1[%c30] : memref<98xf32, #tpu.memory_space<smem>>
    %209 = vector.extract_strided_slice %13 {offsets = [0, 143], sizes = [8, 256], strides = [1, 1]} : vector<8x512xf32> to vector<8x256xf32>
    %210 = vector.broadcast %208 : f32 to vector<8x256xf32>
    %211 = arith.mulf %210, %209 : vector<8x256xf32>
    %212 = arith.addf %207, %211 : vector<8x256xf32>
    %c79 = arith.constant 79 : index
    %213 = memref.load %arg1[%c79] : memref<98xf32, #tpu.memory_space<smem>>
    %214 = vector.extract_strided_slice %14 {offsets = [0, 143], sizes = [8, 256], strides = [1, 1]} : vector<8x512xf32> to vector<8x256xf32>
    %215 = vector.broadcast %213 : f32 to vector<8x256xf32>
    %216 = arith.mulf %215, %214 : vector<8x256xf32>
    %217 = arith.addf %212, %216 : vector<8x256xf32>
    %c37 = arith.constant 37 : index
    %218 = memref.load %arg1[%c37] : memref<98xf32, #tpu.memory_space<smem>>
    %219 = vector.extract_strided_slice %13 {offsets = [0, 159], sizes = [8, 256], strides = [1, 1]} : vector<8x512xf32> to vector<8x256xf32>
    %220 = vector.broadcast %218 : f32 to vector<8x256xf32>
    %221 = arith.mulf %220, %219 : vector<8x256xf32>
    %222 = arith.addf %217, %221 : vector<8x256xf32>
    %c86 = arith.constant 86 : index
    %223 = memref.load %arg1[%c86] : memref<98xf32, #tpu.memory_space<smem>>
    %224 = vector.extract_strided_slice %14 {offsets = [0, 159], sizes = [8, 256], strides = [1, 1]} : vector<8x512xf32> to vector<8x256xf32>
    %225 = vector.broadcast %223 : f32 to vector<8x256xf32>
    %226 = arith.mulf %225, %224 : vector<8x256xf32>
    %227 = arith.addf %222, %226 : vector<8x256xf32>
    %c44 = arith.constant 44 : index
    %228 = memref.load %arg1[%c44] : memref<98xf32, #tpu.memory_space<smem>>
    %229 = vector.extract_strided_slice %13 {offsets = [0, 175], sizes = [8, 256], strides = [1, 1]} : vector<8x512xf32> to vector<8x256xf32>
    %230 = vector.broadcast %228 : f32 to vector<8x256xf32>
    %231 = arith.mulf %230, %229 : vector<8x256xf32>
    %232 = arith.addf %227, %231 : vector<8x256xf32>
    %c93 = arith.constant 93 : index
    %233 = memref.load %arg1[%c93] : memref<98xf32, #tpu.memory_space<smem>>
    %234 = vector.extract_strided_slice %14 {offsets = [0, 175], sizes = [8, 256], strides = [1, 1]} : vector<8x512xf32> to vector<8x256xf32>
    %235 = vector.broadcast %233 : f32 to vector<8x256xf32>
    %236 = arith.mulf %235, %234 : vector<8x256xf32>
    %237 = arith.addf %232, %236 : vector<8x256xf32>
    %c2_14 = arith.constant 2 : index
    %c0_15 = arith.constant 0 : index
    %238 = vector.load %arg3[%c2_14, %c0_15] : memref<7x256xf32, #tpu.memory_space<vmem>>, vector<1x256xf32>
    %239 = vector.broadcast %238 : vector<1x256xf32> to vector<8x256xf32>
    %240 = arith.mulf %239, %237 : vector<8x256xf32>
    %241 = arith.addf %166, %240 : vector<8x256xf32>
    %cst_16 = arith.constant 0.000000e+00 : f32
    %242 = vector.broadcast %cst_16 : f32 to vector<8x256xf32>
    %c3 = arith.constant 3 : index
    %243 = memref.load %arg1[%c3] : memref<98xf32, #tpu.memory_space<smem>>
    %244 = vector.extract_strided_slice %13 {offsets = [0, 80], sizes = [8, 256], strides = [1, 1]} : vector<8x512xf32> to vector<8x256xf32>
    %245 = vector.broadcast %243 : f32 to vector<8x256xf32>
    %246 = arith.mulf %245, %244 : vector<8x256xf32>
    %247 = arith.addf %242, %246 : vector<8x256xf32>
    %c52 = arith.constant 52 : index
    %248 = memref.load %arg1[%c52] : memref<98xf32, #tpu.memory_space<smem>>
    %249 = vector.extract_strided_slice %14 {offsets = [0, 80], sizes = [8, 256], strides = [1, 1]} : vector<8x512xf32> to vector<8x256xf32>
    %250 = vector.broadcast %248 : f32 to vector<8x256xf32>
    %251 = arith.mulf %250, %249 : vector<8x256xf32>
    %252 = arith.addf %247, %251 : vector<8x256xf32>
    %c10 = arith.constant 10 : index
    %253 = memref.load %arg1[%c10] : memref<98xf32, #tpu.memory_space<smem>>
    %254 = vector.extract_strided_slice %13 {offsets = [0, 96], sizes = [8, 256], strides = [1, 1]} : vector<8x512xf32> to vector<8x256xf32>
    %255 = vector.broadcast %253 : f32 to vector<8x256xf32>
    %256 = arith.mulf %255, %254 : vector<8x256xf32>
    %257 = arith.addf %252, %256 : vector<8x256xf32>
    %c59 = arith.constant 59 : index
    %258 = memref.load %arg1[%c59] : memref<98xf32, #tpu.memory_space<smem>>
    %259 = vector.extract_strided_slice %14 {offsets = [0, 96], sizes = [8, 256], strides = [1, 1]} : vector<8x512xf32> to vector<8x256xf32>
    %260 = vector.broadcast %258 : f32 to vector<8x256xf32>
    %261 = arith.mulf %260, %259 : vector<8x256xf32>
    %262 = arith.addf %257, %261 : vector<8x256xf32>
    %c17 = arith.constant 17 : index
    %263 = memref.load %arg1[%c17] : memref<98xf32, #tpu.memory_space<smem>>
    %264 = vector.extract_strided_slice %13 {offsets = [0, 112], sizes = [8, 256], strides = [1, 1]} : vector<8x512xf32> to vector<8x256xf32>
    %265 = vector.broadcast %263 : f32 to vector<8x256xf32>
    %266 = arith.mulf %265, %264 : vector<8x256xf32>
    %267 = arith.addf %262, %266 : vector<8x256xf32>
    %c66 = arith.constant 66 : index
    %268 = memref.load %arg1[%c66] : memref<98xf32, #tpu.memory_space<smem>>
    %269 = vector.extract_strided_slice %14 {offsets = [0, 112], sizes = [8, 256], strides = [1, 1]} : vector<8x512xf32> to vector<8x256xf32>
    %270 = vector.broadcast %268 : f32 to vector<8x256xf32>
    %271 = arith.mulf %270, %269 : vector<8x256xf32>
    %272 = arith.addf %267, %271 : vector<8x256xf32>
    %c24 = arith.constant 24 : index
    %273 = memref.load %arg1[%c24] : memref<98xf32, #tpu.memory_space<smem>>
    %274 = vector.extract_strided_slice %13 {offsets = [0, 128], sizes = [8, 256], strides = [1, 1]} : vector<8x512xf32> to vector<8x256xf32>
    %275 = vector.broadcast %273 : f32 to vector<8x256xf32>
    %276 = arith.mulf %275, %274 : vector<8x256xf32>
    %277 = arith.addf %272, %276 : vector<8x256xf32>
    %c73 = arith.constant 73 : index
    %278 = memref.load %arg1[%c73] : memref<98xf32, #tpu.memory_space<smem>>
    %279 = vector.extract_strided_slice %14 {offsets = [0, 128], sizes = [8, 256], strides = [1, 1]} : vector<8x512xf32> to vector<8x256xf32>
    %280 = vector.broadcast %278 : f32 to vector<8x256xf32>
    %281 = arith.mulf %280, %279 : vector<8x256xf32>
    %282 = arith.addf %277, %281 : vector<8x256xf32>
    %c31 = arith.constant 31 : index
    %283 = memref.load %arg1[%c31] : memref<98xf32, #tpu.memory_space<smem>>
    %284 = vector.extract_strided_slice %13 {offsets = [0, 144], sizes = [8, 256], strides = [1, 1]} : vector<8x512xf32> to vector<8x256xf32>
    %285 = vector.broadcast %283 : f32 to vector<8x256xf32>
    %286 = arith.mulf %285, %284 : vector<8x256xf32>
    %287 = arith.addf %282, %286 : vector<8x256xf32>
    %c80 = arith.constant 80 : index
    %288 = memref.load %arg1[%c80] : memref<98xf32, #tpu.memory_space<smem>>
    %289 = vector.extract_strided_slice %14 {offsets = [0, 144], sizes = [8, 256], strides = [1, 1]} : vector<8x512xf32> to vector<8x256xf32>
    %290 = vector.broadcast %288 : f32 to vector<8x256xf32>
    %291 = arith.mulf %290, %289 : vector<8x256xf32>
    %292 = arith.addf %287, %291 : vector<8x256xf32>
    %c38 = arith.constant 38 : index
    %293 = memref.load %arg1[%c38] : memref<98xf32, #tpu.memory_space<smem>>
    %294 = vector.extract_strided_slice %13 {offsets = [0, 160], sizes = [8, 256], strides = [1, 1]} : vector<8x512xf32> to vector<8x256xf32>
    %295 = vector.broadcast %293 : f32 to vector<8x256xf32>
    %296 = arith.mulf %295, %294 : vector<8x256xf32>
    %297 = arith.addf %292, %296 : vector<8x256xf32>
    %c87 = arith.constant 87 : index
    %298 = memref.load %arg1[%c87] : memref<98xf32, #tpu.memory_space<smem>>
    %299 = vector.extract_strided_slice %14 {offsets = [0, 160], sizes = [8, 256], strides = [1, 1]} : vector<8x512xf32> to vector<8x256xf32>
    %300 = vector.broadcast %298 : f32 to vector<8x256xf32>
    %301 = arith.mulf %300, %299 : vector<8x256xf32>
    %302 = arith.addf %297, %301 : vector<8x256xf32>
    %c45 = arith.constant 45 : index
    %303 = memref.load %arg1[%c45] : memref<98xf32, #tpu.memory_space<smem>>
    %304 = vector.extract_strided_slice %13 {offsets = [0, 176], sizes = [8, 256], strides = [1, 1]} : vector<8x512xf32> to vector<8x256xf32>
    %305 = vector.broadcast %303 : f32 to vector<8x256xf32>
    %306 = arith.mulf %305, %304 : vector<8x256xf32>
    %307 = arith.addf %302, %306 : vector<8x256xf32>
    %c94 = arith.constant 94 : index
    %308 = memref.load %arg1[%c94] : memref<98xf32, #tpu.memory_space<smem>>
    %309 = vector.extract_strided_slice %14 {offsets = [0, 176], sizes = [8, 256], strides = [1, 1]} : vector<8x512xf32> to vector<8x256xf32>
    %310 = vector.broadcast %308 : f32 to vector<8x256xf32>
    %311 = arith.mulf %310, %309 : vector<8x256xf32>
    %312 = arith.addf %307, %311 : vector<8x256xf32>
    %313 = arith.addf %241, %312 : vector<8x256xf32>
    %cst_17 = arith.constant 0.000000e+00 : f32
    %314 = vector.broadcast %cst_17 : f32 to vector<8x256xf32>
    %c4 = arith.constant 4 : index
    %315 = memref.load %arg1[%c4] : memref<98xf32, #tpu.memory_space<smem>>
    %316 = vector.extract_strided_slice %13 {offsets = [0, 81], sizes = [8, 256], strides = [1, 1]} : vector<8x512xf32> to vector<8x256xf32>
    %317 = vector.broadcast %315 : f32 to vector<8x256xf32>
    %318 = arith.mulf %317, %316 : vector<8x256xf32>
    %319 = arith.addf %314, %318 : vector<8x256xf32>
    %c53 = arith.constant 53 : index
    %320 = memref.load %arg1[%c53] : memref<98xf32, #tpu.memory_space<smem>>
    %321 = vector.extract_strided_slice %14 {offsets = [0, 81], sizes = [8, 256], strides = [1, 1]} : vector<8x512xf32> to vector<8x256xf32>
    %322 = vector.broadcast %320 : f32 to vector<8x256xf32>
    %323 = arith.mulf %322, %321 : vector<8x256xf32>
    %324 = arith.addf %319, %323 : vector<8x256xf32>
    %c11 = arith.constant 11 : index
    %325 = memref.load %arg1[%c11] : memref<98xf32, #tpu.memory_space<smem>>
    %326 = vector.extract_strided_slice %13 {offsets = [0, 97], sizes = [8, 256], strides = [1, 1]} : vector<8x512xf32> to vector<8x256xf32>
    %327 = vector.broadcast %325 : f32 to vector<8x256xf32>
    %328 = arith.mulf %327, %326 : vector<8x256xf32>
    %329 = arith.addf %324, %328 : vector<8x256xf32>
    %c60 = arith.constant 60 : index
    %330 = memref.load %arg1[%c60] : memref<98xf32, #tpu.memory_space<smem>>
    %331 = vector.extract_strided_slice %14 {offsets = [0, 97], sizes = [8, 256], strides = [1, 1]} : vector<8x512xf32> to vector<8x256xf32>
    %332 = vector.broadcast %330 : f32 to vector<8x256xf32>
    %333 = arith.mulf %332, %331 : vector<8x256xf32>
    %334 = arith.addf %329, %333 : vector<8x256xf32>
    %c18 = arith.constant 18 : index
    %335 = memref.load %arg1[%c18] : memref<98xf32, #tpu.memory_space<smem>>
    %336 = vector.extract_strided_slice %13 {offsets = [0, 113], sizes = [8, 256], strides = [1, 1]} : vector<8x512xf32> to vector<8x256xf32>
    %337 = vector.broadcast %335 : f32 to vector<8x256xf32>
    %338 = arith.mulf %337, %336 : vector<8x256xf32>
    %339 = arith.addf %334, %338 : vector<8x256xf32>
    %c67 = arith.constant 67 : index
    %340 = memref.load %arg1[%c67] : memref<98xf32, #tpu.memory_space<smem>>
    %341 = vector.extract_strided_slice %14 {offsets = [0, 113], sizes = [8, 256], strides = [1, 1]} : vector<8x512xf32> to vector<8x256xf32>
    %342 = vector.broadcast %340 : f32 to vector<8x256xf32>
    %343 = arith.mulf %342, %341 : vector<8x256xf32>
    %344 = arith.addf %339, %343 : vector<8x256xf32>
    %c25 = arith.constant 25 : index
    %345 = memref.load %arg1[%c25] : memref<98xf32, #tpu.memory_space<smem>>
    %346 = vector.extract_strided_slice %13 {offsets = [0, 129], sizes = [8, 256], strides = [1, 1]} : vector<8x512xf32> to vector<8x256xf32>
    %347 = vector.broadcast %345 : f32 to vector<8x256xf32>
    %348 = arith.mulf %347, %346 : vector<8x256xf32>
    %349 = arith.addf %344, %348 : vector<8x256xf32>
    %c74 = arith.constant 74 : index
    %350 = memref.load %arg1[%c74] : memref<98xf32, #tpu.memory_space<smem>>
    %351 = vector.extract_strided_slice %14 {offsets = [0, 129], sizes = [8, 256], strides = [1, 1]} : vector<8x512xf32> to vector<8x256xf32>
    %352 = vector.broadcast %350 : f32 to vector<8x256xf32>
    %353 = arith.mulf %352, %351 : vector<8x256xf32>
    %354 = arith.addf %349, %353 : vector<8x256xf32>
    %c32 = arith.constant 32 : index
    %355 = memref.load %arg1[%c32] : memref<98xf32, #tpu.memory_space<smem>>
    %356 = vector.extract_strided_slice %13 {offsets = [0, 145], sizes = [8, 256], strides = [1, 1]} : vector<8x512xf32> to vector<8x256xf32>
    %357 = vector.broadcast %355 : f32 to vector<8x256xf32>
    %358 = arith.mulf %357, %356 : vector<8x256xf32>
    %359 = arith.addf %354, %358 : vector<8x256xf32>
    %c81 = arith.constant 81 : index
    %360 = memref.load %arg1[%c81] : memref<98xf32, #tpu.memory_space<smem>>
    %361 = vector.extract_strided_slice %14 {offsets = [0, 145], sizes = [8, 256], strides = [1, 1]} : vector<8x512xf32> to vector<8x256xf32>
    %362 = vector.broadcast %360 : f32 to vector<8x256xf32>
    %363 = arith.mulf %362, %361 : vector<8x256xf32>
    %364 = arith.addf %359, %363 : vector<8x256xf32>
    %c39 = arith.constant 39 : index
    %365 = memref.load %arg1[%c39] : memref<98xf32, #tpu.memory_space<smem>>
    %366 = vector.extract_strided_slice %13 {offsets = [0, 161], sizes = [8, 256], strides = [1, 1]} : vector<8x512xf32> to vector<8x256xf32>
    %367 = vector.broadcast %365 : f32 to vector<8x256xf32>
    %368 = arith.mulf %367, %366 : vector<8x256xf32>
    %369 = arith.addf %364, %368 : vector<8x256xf32>
    %c88 = arith.constant 88 : index
    %370 = memref.load %arg1[%c88] : memref<98xf32, #tpu.memory_space<smem>>
    %371 = vector.extract_strided_slice %14 {offsets = [0, 161], sizes = [8, 256], strides = [1, 1]} : vector<8x512xf32> to vector<8x256xf32>
    %372 = vector.broadcast %370 : f32 to vector<8x256xf32>
    %373 = arith.mulf %372, %371 : vector<8x256xf32>
    %374 = arith.addf %369, %373 : vector<8x256xf32>
    %c46 = arith.constant 46 : index
    %375 = memref.load %arg1[%c46] : memref<98xf32, #tpu.memory_space<smem>>
    %376 = vector.extract_strided_slice %13 {offsets = [0, 177], sizes = [8, 256], strides = [1, 1]} : vector<8x512xf32> to vector<8x256xf32>
    %377 = vector.broadcast %375 : f32 to vector<8x256xf32>
    %378 = arith.mulf %377, %376 : vector<8x256xf32>
    %379 = arith.addf %374, %378 : vector<8x256xf32>
    %c95 = arith.constant 95 : index
    %380 = memref.load %arg1[%c95] : memref<98xf32, #tpu.memory_space<smem>>
    %381 = vector.extract_strided_slice %14 {offsets = [0, 177], sizes = [8, 256], strides = [1, 1]} : vector<8x512xf32> to vector<8x256xf32>
    %382 = vector.broadcast %380 : f32 to vector<8x256xf32>
    %383 = arith.mulf %382, %381 : vector<8x256xf32>
    %384 = arith.addf %379, %383 : vector<8x256xf32>
    %c4_18 = arith.constant 4 : index
    %c0_19 = arith.constant 0 : index
    %385 = vector.load %arg3[%c4_18, %c0_19] : memref<7x256xf32, #tpu.memory_space<vmem>>, vector<1x256xf32>
    %386 = vector.broadcast %385 : vector<1x256xf32> to vector<8x256xf32>
    %387 = arith.mulf %386, %384 : vector<8x256xf32>
    %388 = arith.addf %313, %387 : vector<8x256xf32>
    %cst_20 = arith.constant 0.000000e+00 : f32
    %389 = vector.broadcast %cst_20 : f32 to vector<8x256xf32>
    %c5 = arith.constant 5 : index
    %390 = memref.load %arg1[%c5] : memref<98xf32, #tpu.memory_space<smem>>
    %391 = vector.extract_strided_slice %13 {offsets = [0, 82], sizes = [8, 256], strides = [1, 1]} : vector<8x512xf32> to vector<8x256xf32>
    %392 = vector.broadcast %390 : f32 to vector<8x256xf32>
    %393 = arith.mulf %392, %391 : vector<8x256xf32>
    %394 = arith.addf %389, %393 : vector<8x256xf32>
    %c54 = arith.constant 54 : index
    %395 = memref.load %arg1[%c54] : memref<98xf32, #tpu.memory_space<smem>>
    %396 = vector.extract_strided_slice %14 {offsets = [0, 82], sizes = [8, 256], strides = [1, 1]} : vector<8x512xf32> to vector<8x256xf32>
    %397 = vector.broadcast %395 : f32 to vector<8x256xf32>
    %398 = arith.mulf %397, %396 : vector<8x256xf32>
    %399 = arith.addf %394, %398 : vector<8x256xf32>
    %c12 = arith.constant 12 : index
    %400 = memref.load %arg1[%c12] : memref<98xf32, #tpu.memory_space<smem>>
    %401 = vector.extract_strided_slice %13 {offsets = [0, 98], sizes = [8, 256], strides = [1, 1]} : vector<8x512xf32> to vector<8x256xf32>
    %402 = vector.broadcast %400 : f32 to vector<8x256xf32>
    %403 = arith.mulf %402, %401 : vector<8x256xf32>
    %404 = arith.addf %399, %403 : vector<8x256xf32>
    %c61 = arith.constant 61 : index
    %405 = memref.load %arg1[%c61] : memref<98xf32, #tpu.memory_space<smem>>
    %406 = vector.extract_strided_slice %14 {offsets = [0, 98], sizes = [8, 256], strides = [1, 1]} : vector<8x512xf32> to vector<8x256xf32>
    %407 = vector.broadcast %405 : f32 to vector<8x256xf32>
    %408 = arith.mulf %407, %406 : vector<8x256xf32>
    %409 = arith.addf %404, %408 : vector<8x256xf32>
    %c19 = arith.constant 19 : index
    %410 = memref.load %arg1[%c19] : memref<98xf32, #tpu.memory_space<smem>>
    %411 = vector.extract_strided_slice %13 {offsets = [0, 114], sizes = [8, 256], strides = [1, 1]} : vector<8x512xf32> to vector<8x256xf32>
    %412 = vector.broadcast %410 : f32 to vector<8x256xf32>
    %413 = arith.mulf %412, %411 : vector<8x256xf32>
    %414 = arith.addf %409, %413 : vector<8x256xf32>
    %c68 = arith.constant 68 : index
    %415 = memref.load %arg1[%c68] : memref<98xf32, #tpu.memory_space<smem>>
    %416 = vector.extract_strided_slice %14 {offsets = [0, 114], sizes = [8, 256], strides = [1, 1]} : vector<8x512xf32> to vector<8x256xf32>
    %417 = vector.broadcast %415 : f32 to vector<8x256xf32>
    %418 = arith.mulf %417, %416 : vector<8x256xf32>
    %419 = arith.addf %414, %418 : vector<8x256xf32>
    %c26 = arith.constant 26 : index
    %420 = memref.load %arg1[%c26] : memref<98xf32, #tpu.memory_space<smem>>
    %421 = vector.extract_strided_slice %13 {offsets = [0, 130], sizes = [8, 256], strides = [1, 1]} : vector<8x512xf32> to vector<8x256xf32>
    %422 = vector.broadcast %420 : f32 to vector<8x256xf32>
    %423 = arith.mulf %422, %421 : vector<8x256xf32>
    %424 = arith.addf %419, %423 : vector<8x256xf32>
    %c75 = arith.constant 75 : index
    %425 = memref.load %arg1[%c75] : memref<98xf32, #tpu.memory_space<smem>>
    %426 = vector.extract_strided_slice %14 {offsets = [0, 130], sizes = [8, 256], strides = [1, 1]} : vector<8x512xf32> to vector<8x256xf32>
    %427 = vector.broadcast %425 : f32 to vector<8x256xf32>
    %428 = arith.mulf %427, %426 : vector<8x256xf32>
    %429 = arith.addf %424, %428 : vector<8x256xf32>
    %c33 = arith.constant 33 : index
    %430 = memref.load %arg1[%c33] : memref<98xf32, #tpu.memory_space<smem>>
    %431 = vector.extract_strided_slice %13 {offsets = [0, 146], sizes = [8, 256], strides = [1, 1]} : vector<8x512xf32> to vector<8x256xf32>
    %432 = vector.broadcast %430 : f32 to vector<8x256xf32>
    %433 = arith.mulf %432, %431 : vector<8x256xf32>
    %434 = arith.addf %429, %433 : vector<8x256xf32>
    %c82 = arith.constant 82 : index
    %435 = memref.load %arg1[%c82] : memref<98xf32, #tpu.memory_space<smem>>
    %436 = vector.extract_strided_slice %14 {offsets = [0, 146], sizes = [8, 256], strides = [1, 1]} : vector<8x512xf32> to vector<8x256xf32>
    %437 = vector.broadcast %435 : f32 to vector<8x256xf32>
    %438 = arith.mulf %437, %436 : vector<8x256xf32>
    %439 = arith.addf %434, %438 : vector<8x256xf32>
    %c40 = arith.constant 40 : index
    %440 = memref.load %arg1[%c40] : memref<98xf32, #tpu.memory_space<smem>>
    %441 = vector.extract_strided_slice %13 {offsets = [0, 162], sizes = [8, 256], strides = [1, 1]} : vector<8x512xf32> to vector<8x256xf32>
    %442 = vector.broadcast %440 : f32 to vector<8x256xf32>
    %443 = arith.mulf %442, %441 : vector<8x256xf32>
    %444 = arith.addf %439, %443 : vector<8x256xf32>
    %c89 = arith.constant 89 : index
    %445 = memref.load %arg1[%c89] : memref<98xf32, #tpu.memory_space<smem>>
    %446 = vector.extract_strided_slice %14 {offsets = [0, 162], sizes = [8, 256], strides = [1, 1]} : vector<8x512xf32> to vector<8x256xf32>
    %447 = vector.broadcast %445 : f32 to vector<8x256xf32>
    %448 = arith.mulf %447, %446 : vector<8x256xf32>
    %449 = arith.addf %444, %448 : vector<8x256xf32>
    %c47 = arith.constant 47 : index
    %450 = memref.load %arg1[%c47] : memref<98xf32, #tpu.memory_space<smem>>
    %451 = vector.extract_strided_slice %13 {offsets = [0, 178], sizes = [8, 256], strides = [1, 1]} : vector<8x512xf32> to vector<8x256xf32>
    %452 = vector.broadcast %450 : f32 to vector<8x256xf32>
    %453 = arith.mulf %452, %451 : vector<8x256xf32>
    %454 = arith.addf %449, %453 : vector<8x256xf32>
    %c96 = arith.constant 96 : index
    %455 = memref.load %arg1[%c96] : memref<98xf32, #tpu.memory_space<smem>>
    %456 = vector.extract_strided_slice %14 {offsets = [0, 178], sizes = [8, 256], strides = [1, 1]} : vector<8x512xf32> to vector<8x256xf32>
    %457 = vector.broadcast %455 : f32 to vector<8x256xf32>
    %458 = arith.mulf %457, %456 : vector<8x256xf32>
    %459 = arith.addf %454, %458 : vector<8x256xf32>
    %c5_21 = arith.constant 5 : index
    %c0_22 = arith.constant 0 : index
    %460 = vector.load %arg3[%c5_21, %c0_22] : memref<7x256xf32, #tpu.memory_space<vmem>>, vector<1x256xf32>
    %461 = vector.broadcast %460 : vector<1x256xf32> to vector<8x256xf32>
    %462 = arith.mulf %461, %459 : vector<8x256xf32>
    %463 = arith.addf %388, %462 : vector<8x256xf32>
    %cst_23 = arith.constant 0.000000e+00 : f32
    %464 = vector.broadcast %cst_23 : f32 to vector<8x256xf32>
    %c6 = arith.constant 6 : index
    %465 = memref.load %arg1[%c6] : memref<98xf32, #tpu.memory_space<smem>>
    %466 = vector.extract_strided_slice %13 {offsets = [0, 83], sizes = [8, 256], strides = [1, 1]} : vector<8x512xf32> to vector<8x256xf32>
    %467 = vector.broadcast %465 : f32 to vector<8x256xf32>
    %468 = arith.mulf %467, %466 : vector<8x256xf32>
    %469 = arith.addf %464, %468 : vector<8x256xf32>
    %c55 = arith.constant 55 : index
    %470 = memref.load %arg1[%c55] : memref<98xf32, #tpu.memory_space<smem>>
    %471 = vector.extract_strided_slice %14 {offsets = [0, 83], sizes = [8, 256], strides = [1, 1]} : vector<8x512xf32> to vector<8x256xf32>
    %472 = vector.broadcast %470 : f32 to vector<8x256xf32>
    %473 = arith.mulf %472, %471 : vector<8x256xf32>
    %474 = arith.addf %469, %473 : vector<8x256xf32>
    %c13 = arith.constant 13 : index
    %475 = memref.load %arg1[%c13] : memref<98xf32, #tpu.memory_space<smem>>
    %476 = vector.extract_strided_slice %13 {offsets = [0, 99], sizes = [8, 256], strides = [1, 1]} : vector<8x512xf32> to vector<8x256xf32>
    %477 = vector.broadcast %475 : f32 to vector<8x256xf32>
    %478 = arith.mulf %477, %476 : vector<8x256xf32>
    %479 = arith.addf %474, %478 : vector<8x256xf32>
    %c62 = arith.constant 62 : index
    %480 = memref.load %arg1[%c62] : memref<98xf32, #tpu.memory_space<smem>>
    %481 = vector.extract_strided_slice %14 {offsets = [0, 99], sizes = [8, 256], strides = [1, 1]} : vector<8x512xf32> to vector<8x256xf32>
    %482 = vector.broadcast %480 : f32 to vector<8x256xf32>
    %483 = arith.mulf %482, %481 : vector<8x256xf32>
    %484 = arith.addf %479, %483 : vector<8x256xf32>
    %c20 = arith.constant 20 : index
    %485 = memref.load %arg1[%c20] : memref<98xf32, #tpu.memory_space<smem>>
    %486 = vector.extract_strided_slice %13 {offsets = [0, 115], sizes = [8, 256], strides = [1, 1]} : vector<8x512xf32> to vector<8x256xf32>
    %487 = vector.broadcast %485 : f32 to vector<8x256xf32>
    %488 = arith.mulf %487, %486 : vector<8x256xf32>
    %489 = arith.addf %484, %488 : vector<8x256xf32>
    %c69 = arith.constant 69 : index
    %490 = memref.load %arg1[%c69] : memref<98xf32, #tpu.memory_space<smem>>
    %491 = vector.extract_strided_slice %14 {offsets = [0, 115], sizes = [8, 256], strides = [1, 1]} : vector<8x512xf32> to vector<8x256xf32>
    %492 = vector.broadcast %490 : f32 to vector<8x256xf32>
    %493 = arith.mulf %492, %491 : vector<8x256xf32>
    %494 = arith.addf %489, %493 : vector<8x256xf32>
    %c27 = arith.constant 27 : index
    %495 = memref.load %arg1[%c27] : memref<98xf32, #tpu.memory_space<smem>>
    %496 = vector.extract_strided_slice %13 {offsets = [0, 131], sizes = [8, 256], strides = [1, 1]} : vector<8x512xf32> to vector<8x256xf32>
    %497 = vector.broadcast %495 : f32 to vector<8x256xf32>
    %498 = arith.mulf %497, %496 : vector<8x256xf32>
    %499 = arith.addf %494, %498 : vector<8x256xf32>
    %c76 = arith.constant 76 : index
    %500 = memref.load %arg1[%c76] : memref<98xf32, #tpu.memory_space<smem>>
    %501 = vector.extract_strided_slice %14 {offsets = [0, 131], sizes = [8, 256], strides = [1, 1]} : vector<8x512xf32> to vector<8x256xf32>
    %502 = vector.broadcast %500 : f32 to vector<8x256xf32>
    %503 = arith.mulf %502, %501 : vector<8x256xf32>
    %504 = arith.addf %499, %503 : vector<8x256xf32>
    %c34 = arith.constant 34 : index
    %505 = memref.load %arg1[%c34] : memref<98xf32, #tpu.memory_space<smem>>
    %506 = vector.extract_strided_slice %13 {offsets = [0, 147], sizes = [8, 256], strides = [1, 1]} : vector<8x512xf32> to vector<8x256xf32>
    %507 = vector.broadcast %505 : f32 to vector<8x256xf32>
    %508 = arith.mulf %507, %506 : vector<8x256xf32>
    %509 = arith.addf %504, %508 : vector<8x256xf32>
    %c83 = arith.constant 83 : index
    %510 = memref.load %arg1[%c83] : memref<98xf32, #tpu.memory_space<smem>>
    %511 = vector.extract_strided_slice %14 {offsets = [0, 147], sizes = [8, 256], strides = [1, 1]} : vector<8x512xf32> to vector<8x256xf32>
    %512 = vector.broadcast %510 : f32 to vector<8x256xf32>
    %513 = arith.mulf %512, %511 : vector<8x256xf32>
    %514 = arith.addf %509, %513 : vector<8x256xf32>
    %c41 = arith.constant 41 : index
    %515 = memref.load %arg1[%c41] : memref<98xf32, #tpu.memory_space<smem>>
    %516 = vector.extract_strided_slice %13 {offsets = [0, 163], sizes = [8, 256], strides = [1, 1]} : vector<8x512xf32> to vector<8x256xf32>
    %517 = vector.broadcast %515 : f32 to vector<8x256xf32>
    %518 = arith.mulf %517, %516 : vector<8x256xf32>
    %519 = arith.addf %514, %518 : vector<8x256xf32>
    %c90 = arith.constant 90 : index
    %520 = memref.load %arg1[%c90] : memref<98xf32, #tpu.memory_space<smem>>
    %521 = vector.extract_strided_slice %14 {offsets = [0, 163], sizes = [8, 256], strides = [1, 1]} : vector<8x512xf32> to vector<8x256xf32>
    %522 = vector.broadcast %520 : f32 to vector<8x256xf32>
    %523 = arith.mulf %522, %521 : vector<8x256xf32>
    %524 = arith.addf %519, %523 : vector<8x256xf32>
    %c48 = arith.constant 48 : index
    %525 = memref.load %arg1[%c48] : memref<98xf32, #tpu.memory_space<smem>>
    %526 = vector.extract_strided_slice %13 {offsets = [0, 179], sizes = [8, 256], strides = [1, 1]} : vector<8x512xf32> to vector<8x256xf32>
    %527 = vector.broadcast %525 : f32 to vector<8x256xf32>
    %528 = arith.mulf %527, %526 : vector<8x256xf32>
    %529 = arith.addf %524, %528 : vector<8x256xf32>
    %c97 = arith.constant 97 : index
    %530 = memref.load %arg1[%c97] : memref<98xf32, #tpu.memory_space<smem>>
    %531 = vector.extract_strided_slice %14 {offsets = [0, 179], sizes = [8, 256], strides = [1, 1]} : vector<8x512xf32> to vector<8x256xf32>
    %532 = vector.broadcast %530 : f32 to vector<8x256xf32>
    %533 = arith.mulf %532, %531 : vector<8x256xf32>
    %534 = arith.addf %529, %533 : vector<8x256xf32>
    %c6_24 = arith.constant 6 : index
    %c0_25 = arith.constant 0 : index
    %535 = vector.load %arg3[%c6_24, %c0_25] : memref<7x256xf32, #tpu.memory_space<vmem>>, vector<1x256xf32>
    %536 = vector.broadcast %535 : vector<1x256xf32> to vector<8x256xf32>
    %537 = arith.mulf %536, %534 : vector<8x256xf32>
    %538 = arith.addf %463, %537 : vector<8x256xf32>
    %cst_26 = arith.constant 0.000000e+00 : f32
    %539 = vector.broadcast %cst_26 : f32 to vector<8x256xf32>
    %540 = arith.subf %539, %538 : vector<8x256xf32>
    %541 = math.exp %540 : vector<8x256xf32>
    %cst_27 = arith.constant 1.000000e+00 : f32
    %542 = vector.broadcast %cst_27 : f32 to vector<8x256xf32>
    %543 = arith.addf %542, %541 : vector<8x256xf32>
    %cst_28 = arith.constant 1.000000e+00 : f32
    %544 = vector.broadcast %cst_28 : f32 to vector<8x256xf32>
    %545 = arith.divf %544, %543 : vector<8x256xf32>
    %c0_29 = arith.constant 0 : index
    %c0_30 = arith.constant 0 : index
    %546 = vector.load %arg4[%c0_29, %c0_30] : memref<8x1024xf32, #tpu.memory_space<vmem>>, vector<8x256xf32>
    %547 = arith.mulf %546, %545 : vector<8x256xf32>
    %c0_31 = arith.constant 0 : index
    %c0_32 = arith.constant 0 : index
    %548 = vector.load %arg5[%c0_31, %c0_32] : memref<8x1024xf32, #tpu.memory_space<vmem>>, vector<8x256xf32>
    tpu.vector_store %arg5[%c0_31, %c0_32], %547 {strides = array<i32>} : memref<8x1024xf32, #tpu.memory_space<vmem>>, vector<8x256xf32>,
    %c0_33 = arith.constant 0 : index
    %c256_34 = arith.constant 256 : index
    %549 = vector.load %arg4[%c0_33, %c256_34] : memref<8x1024xf32, #tpu.memory_space<vmem>>, vector<8x256xf32>
    %550 = arith.mulf %549, %545 : vector<8x256xf32>
    %c0_35 = arith.constant 0 : index
    %c256_36 = arith.constant 256 : index
    %551 = vector.load %arg5[%c0_35, %c256_36] : memref<8x1024xf32, #tpu.memory_space<vmem>>, vector<8x256xf32>
    tpu.vector_store %arg5[%c0_35, %c256_36], %550 {strides = array<i32>} : memref<8x1024xf32, #tpu.memory_space<vmem>>, vector<8x256xf32>,
    %c0_37 = arith.constant 0 : index
    %c512_38 = arith.constant 512 : index
    %552 = vector.load %arg4[%c0_37, %c512_38] : memref<8x1024xf32, #tpu.memory_space<vmem>>, vector<8x256xf32>
    %553 = arith.mulf %552, %545 : vector<8x256xf32>
    %c0_39 = arith.constant 0 : index
    %c512_40 = arith.constant 512 : index
    %554 = vector.load %arg5[%c0_39, %c512_40] : memref<8x1024xf32, #tpu.memory_space<vmem>>, vector<8x256xf32>
    tpu.vector_store %arg5[%c0_39, %c512_40], %553 {strides = array<i32>} : memref<8x1024xf32, #tpu.memory_space<vmem>>, vector<8x256xf32>,
    %c0_41 = arith.constant 0 : index
    %c768_42 = arith.constant 768 : index
    %555 = vector.load %arg4[%c0_41, %c768_42] : memref<8x1024xf32, #tpu.memory_space<vmem>>, vector<8x256xf32>
    %556 = arith.mulf %555, %545 : vector<8x256xf32>
    %c0_43 = arith.constant 0 : index
    %c768_44 = arith.constant 768 : index
    %557 = vector.load %arg5[%c0_43, %c768_44] : memref<8x1024xf32, #tpu.memory_space<vmem>>, vector<8x256xf32>
    tpu.vector_store %arg5[%c0_43, %c768_44], %556 {strides = array<i32>} : memref<8x1024xf32, #tpu.memory_space<vmem>>, vector<8x256xf32>,
    return
  }
  func.func @transform_0(%arg0: i32) -> i32 {
    %c0_i32 = arith.constant 0 : i32
    %c0_i32_0 = arith.constant 0 : i32
    return %c0_i32 : i32
  }
  func.func @transform_1(%arg0: i32) -> i32 {
    %c0_i32 = arith.constant 0 : i32
    %c0_i32_0 = arith.constant 0 : i32
    return %c0_i32 : i32
  }
  func.func @transform_2(%arg0: i32) -> (i32, i32) {
    %c0_i32 = arith.constant 0 : i32
    %c0_i32_0 = arith.constant 0 : i32
    %c0_i32_1 = arith.constant 0 : i32
    return %c0_i32, %c0_i32_0 : i32, i32
  }
  func.func @transform_3(%arg0: i32) -> (i32, i32) {
    %c0_i32 = arith.constant 0 : i32
    %c0_i32_0 = arith.constant 0 : i32
    return %arg0, %c0_i32 : i32, i32
  }
  func.func @transform_4(%arg0: i32) -> (i32, i32) {
    %c0_i32 = arith.constant 0 : i32
    %c0_i32_0 = arith.constant 0 : i32
    return %arg0, %c0_i32 : i32, i32
  }
}

</mosaic_0001>

<llo_original>
// kernel: tpu_custom_call.1
$region0: #{tpu_custom_call.1}
  #allocation0 [shape = 'u32[]', space=smem, size = 0x4, offset = 0x4, fixed_abs, tag = 'smem constant byte address 0x4 - core index']
  #allocation1 [shape = 'u32[144,128]{1,0:T(1,128)}', space=vmem, size = 0x12000, scoped, tag = 'internal scratch']
  #allocation2 [shape = 'f32[1]{0:T(128)S(6)}', space=smem, size = 0x200, scoped, tag = 'scoped memory for tpu_custom_call.1']
  %s0 = inlined_call_operand.vmem [shape: f32[98], index: 0, kind: input, shape index: {}]
  %s1 = inlined_call_operand.<no memory space> [shape: f32[1], index: 1, kind: input, shape index: {}]
  %s2 = inlined_call_operand.hbm [shape: f32[7,256], index: 2, kind: input, shape index: {}]
  %s3 = inlined_call_operand.hbm [shape: f32[8,1024], index: 3, kind: input, shape index: {}]
  %s4 = inlined_call_operand.hbm [shape: f32[8,1024], index: 4, kind: output, shape index: {}]
  %s5 = sld [smem:[#allocation0]]
  $region38: #{tpu_custom_call.1} parent=0
    _
  %s7 = ssub.s32 1, %s5
  %s8 = scalar_select 0, %s7, %s5
  %9 = sst [smem:[#allocation2]] %s1
  $region1: #{tpu_custom_call.1} parent=0
    #allocation3 [shape = 'u8[512]{0}', space=smem, size = 0x200, scoped, tag = 'input window, operand 0, single buffered']
    #allocation4 [shape = 's32[1]{0}', space=sflag, size = 0x4, scoped, tag = 'scoped memory for tpu_custom_call.1']
    #allocation5 [shape = 's32[1]{0}', space=sflag, size = 0x4, scoped, tag = 'scoped memory for tpu_custom_call.1']
    #allocation6 [shape = 's32[1]{0}', space=sflag, size = 0x4, scoped, tag = 'scoped memory for tpu_custom_call.1']
    #allocation7 [shape = 'u8[8192]{0}', space=vmem, size = 0x2000, scoped, tag = 'input window, operand 2, single buffered']
    #allocation8 [shape = 'u8[32768]{0}', space=vmem, size = 0x8000, scoped, tag = 'input window, operand 3, single buffered']
    #allocation9 [shape = 's32[1]{0}', space=sflag, size = 0x4, scoped, tag = 'scoped memory for tpu_custom_call.1']
    #allocation10 [shape = 'u8[32768]{0}', space=vmem, size = 0x8000, scoped, tag = 'output window, operand 0, single buffered']
    %10 = vsyncpa [#allocation6], 0
    %11 = vsyncpa [#allocation4], 0
    %12 = vsyncpa [#allocation9], 0
    %13 = vsyncpa [#allocation5], 0
    // Predicated region
    $region2: #{tpu_custom_call.1} parent=1 // pred_check
      _
    $region3: #{tpu_custom_call.1} parent=1 // pred_check_branch
      %15 = sbr.rel (0) target = $region5
    $region4: #{tpu_custom_call.1} parent=1 // pred_region
      %s17 = ssub.s32 16, 16
      %18 = vsyncadd [#allocation6], %s17
      %s20 = sshll.u32 %s0, 4
      %s21 = int_to_ptr.vmem [resolvable:$true] %s20
      %23 = dma.vmem_to_smem %s21, 16, [#allocation3], [#allocation6]
    $region5: #{tpu_custom_call.1} parent=1 // pred_fallthru
      _
    // Predicated region
    $region6: #{tpu_custom_call.1} parent=1 // pred_check
      _
    $region7: #{tpu_custom_call.1} parent=1 // pred_check_branch
      %25 = sbr.rel (0) target = $region9
    $region8: #{tpu_custom_call.1} parent=1 // pred_region
      _
    $region9: #{tpu_custom_call.1} parent=1 // pred_fallthru
      _
    // Predicated region
    $region10: #{tpu_custom_call.1} parent=1 // pred_check
      _
    $region11: #{tpu_custom_call.1} parent=1 // pred_check_branch
      %27 = sbr.rel (0) target = $region13
    $region12: #{tpu_custom_call.1} parent=1 // pred_region
      %s29 = ssub.s32 256, 256
      %30 = vsyncadd [#allocation4], %s29
      %s32 = sshll.u32 [#allocation7], 4
      %s33 = int_to_ptr.vmem [resolvable:$true] %s32
      %35 = dma.hbm_to_vmem [thread:$0]  %s2, 256, %s33, [#allocation4]
    $region13: #{tpu_custom_call.1} parent=1 // pred_fallthru
      _
    // Predicated region
    $region14: #{tpu_custom_call.1} parent=1 // pred_check
      _
    $region15: #{tpu_custom_call.1} parent=1 // pred_check_branch
      %37 = sbr.rel (0) target = $region17
    $region16: #{tpu_custom_call.1} parent=1 // pred_region
      %s39 = ssub.s32 1024, 1024
      %40 = vsyncadd [#allocation9], %s39
      %s42 = sshll.u32 [#allocation8], 4
      %s43 = int_to_ptr.vmem [resolvable:$true] %s42
      %45 = dma.hbm_to_vmem [thread:$0]  %s3, 1024, %s43, [#allocation9]
    $region17: #{tpu_custom_call.1} parent=1 // pred_fallthru
      _
    // Predicated region
    $region18: #{tpu_custom_call.1} parent=1 // pred_check
      _
    $region19: #{tpu_custom_call.1} parent=1 // pred_check_branch
      %47 = sbr.rel (0) target = $region21
    $region20: #{tpu_custom_call.1} parent=1 // pred_region
      %48 = dma.done [#allocation6], 16
    $region21: #{tpu_custom_call.1} parent=1 // pred_fallthru
      _
    // Predicated region
    $region22: #{tpu_custom_call.1} parent=1 // pred_check
      _
    $region23: #{tpu_custom_call.1} parent=1 // pred_check_branch
      %50 = sbr.rel (0) target = $region25
    $region24: #{tpu_custom_call.1} parent=1 // pred_region
      %51 = dma.done [#allocation4], 256
    $region25: #{tpu_custom_call.1} parent=1 // pred_fallthru
      _
    // Predicated region
    $region26: #{tpu_custom_call.1} parent=1 // pred_check
      _
    $region27: #{tpu_custom_call.1} parent=1 // pred_check_branch
      %53 = sbr.rel (0) target = $region29
    $region28: #{tpu_custom_call.1} parent=1 // pred_region
      %54 = dma.done [#allocation9], 1024
    $region29: #{tpu_custom_call.1} parent=1 // pred_fallthru
      _
    %55 = sfence
    %v56 = vld [vmem:[#allocation8] sm:$0xff]
    %v57 = vld [vmem:[#allocation8 + $0x8] sm:$0xff]
    %v58 = vld [vmem:[#allocation8 + $0x10] sm:$0xff]
    %v59 = vld [vmem:[#allocation8 + $0x18] sm:$0xff]
    %v60 = vmax.f32 %v56, %v58
    %v61 = vmax.f32 %v57, %v59
    %v62 = vadd.f32 %v56, %v58
    %v63 = vadd.f32 %v57, %v59
    %v64 = vld [vmem:[#allocation8 + $0x20] sm:$0xff]
    %v65 = vld [vmem:[#allocation8 + $0x28] sm:$0xff]
    %v66 = vmax.f32 %v60, %v64
    %v67 = vmax.f32 %v61, %v65
    %v68 = vadd.f32 %v62, %v64
    %v69 = vadd.f32 %v63, %v65
    %v70 = vld [vmem:[#allocation8 + $0x30] sm:$0xff]
    %v71 = vld [vmem:[#allocation8 + $0x38] sm:$0xff]
    %v72 = vmax.f32 %v66, %v70
    %v73 = vmax.f32 %v67, %v71
    %v74 = vadd.f32 %v68, %v70
    %v75 = vadd.f32 %v69, %v71
    %v76 = vmul.f32 %v74, 0.25
    %v77 = vmul.f32 %v75, 0.25
    %s78 = sld [smem:[#allocation2]]
    %v79 = vstv %s78
    %s80 = sld [smem:[#allocation3]]
    %v81 = vstv %s80
    %v82 = vmul.f32 %v81, 0.0
    %v83 = vmul.f32 %v81, %v72
    %v84 = vmul.f32 %v81, %v73
    %v85 = vadd.f32 %v82, 0.0
    %v86 = vadd.f32 %v83, 0.0
    %v87 = vadd.f32 %v84, 0.0
    %s88 = sld [smem:[#allocation3 + $0x31]]
    %v89 = vstv %s88
    %v90 = vmul.f32 %v89, 0.0
    %v91 = vmul.f32 %v89, %v76
    %v92 = vmul.f32 %v89, %v77
    %v93 = vadd.f32 %v85, %v90
    %v94 = vadd.f32 %v86, %v91
    %v95 = vadd.f32 %v87, %v92
    %s96 = sld [smem:[#allocation3 + $0x7]]
    %v97 = vstv %s96
    %v98 = vmul.f32 %v97, 0.0
    %v99 = vmul.f32 %v97, %v72
    %v100 = vmul.f32 %v97, %v73
    %104 = vrot.lane.b32.xlu0 %v98, 112
    %v105 = vpop.permute.xlu0 %104
    %106 = vrot.lane.b32.xlu0 %v99, 112
    %v107 = vpop.permute.xlu0 %106
    %108 = vrot.lane.b32.xlu0 %v100, 112
    %v109 = vpop.permute.xlu0 %108
    %vm110 = vcmask 916480
    %v111 = vsel %vm110, %v105, %v107
    %v112 = vsel %vm110, %v107, %v109
    %v116 = vadd.f32 %v93, %v111
    %v117 = vadd.f32 %v94, %v112
    %v118 = vadd.f32 %v95, %v109
    %s119 = sld [smem:[#allocation3 + $0x38]]
    %v120 = vstv %s119
    %v121 = vmul.f32 %v120, 0.0
    %v122 = vmul.f32 %v120, %v76
    %v123 = vmul.f32 %v120, %v77
    %127 = vrot.lane.b32.xlu0 %v121, 112
    %v128 = vpop.permute.xlu0 %127
    %129 = vrot.lane.b32.xlu0 %v122, 112
    %v130 = vpop.permute.xlu0 %129
    %131 = vrot.lane.b32.xlu0 %v123, 112
    %v132 = vpop.permute.xlu0 %131
    %v133 = vsel %vm110, %v128, %v130
    %v134 = vsel %vm110, %v130, %v132
    %v138 = vadd.f32 %v116, %v133
    %v139 = vadd.f32 %v117, %v134
    %v140 = vadd.f32 %v118, %v132
    %s141 = sld [smem:[#allocation3 + $0xe]]
    %v142 = vstv %s141
    %v143 = vmul.f32 %v142, 0.0
    %v144 = vmul.f32 %v142, %v72
    %v145 = vmul.f32 %v142, %v73
    %149 = vrot.lane.b32.xlu0 %v143, 96
    %v150 = vpop.permute.xlu0 %149
    %151 = vrot.lane.b32.xlu0 %v144, 96
    %v152 = vpop.permute.xlu0 %151
    %153 = vrot.lane.b32.xlu0 %v145, 96
    %v154 = vpop.permute.xlu0 %153
    %vm155 = vcmask 785408
    %v156 = vsel %vm155, %v150, %v152
    %v157 = vsel %vm155, %v152, %v154
    %v161 = vadd.f32 %v138, %v156
    %v162 = vadd.f32 %v139, %v157
    %v163 = vadd.f32 %v140, %v154
    %s164 = sld [smem:[#allocation3 + $0x3f]]
    %v165 = vstv %s164
    %v166 = vmul.f32 %v165, 0.0
    %v167 = vmul.f32 %v165, %v76
    %v168 = vmul.f32 %v165, %v77
    %172 = vrot.lane.b32.xlu0 %v166, 96
    %v173 = vpop.permute.xlu0 %172
    %174 = vrot.lane.b32.xlu0 %v167, 96
    %v175 = vpop.permute.xlu0 %174
    %176 = vrot.lane.b32.xlu0 %v168, 96
    %v177 = vpop.permute.xlu0 %176
    %v178 = vsel %vm155, %v173, %v175
    %v179 = vsel %vm155, %v175, %v177
    %v183 = vadd.f32 %v161, %v178
    %v184 = vadd.f32 %v162, %v179
    %v185 = vadd.f32 %v163, %v177
    %s186 = sld [smem:[#allocation3 + $0x15]]
    %v187 = vstv %s186
    %v188 = vmul.f32 %v187, 0.0
    %v189 = vmul.f32 %v187, %v72
    %v190 = vmul.f32 %v187, %v73
    %194 = vrot.lane.b32.xlu0 %v188, 80
    %v195 = vpop.permute.xlu0 %194
    %196 = vrot.lane.b32.xlu0 %v189, 80
    %v197 = vpop.permute.xlu0 %196
    %198 = vrot.lane.b32.xlu0 %v190, 80
    %v199 = vpop.permute.xlu0 %198
    %vm200 = vcmask 654336
    %v201 = vsel %vm200, %v195, %v197
    %v202 = vsel %vm200, %v197, %v199
    %v206 = vadd.f32 %v183, %v201
    %v207 = vadd.f32 %v184, %v202
    %v208 = vadd.f32 %v185, %v199
    %s209 = sld [smem:[#allocation3 + $0x46]]
    %v210 = vstv %s209
    %v211 = vmul.f32 %v210, 0.0
    %v212 = vmul.f32 %v210, %v76
    %v213 = vmul.f32 %v210, %v77
    %217 = vrot.lane.b32.xlu0 %v211, 80
    %v218 = vpop.permute.xlu0 %217
    %219 = vrot.lane.b32.xlu0 %v212, 80
    %v220 = vpop.permute.xlu0 %219
    %221 = vrot.lane.b32.xlu0 %v213, 80
    %v222 = vpop.permute.xlu0 %221
    %v223 = vsel %vm200, %v218, %v220
    %v224 = vsel %vm200, %v220, %v222
    %v228 = vadd.f32 %v206, %v223
    %v229 = vadd.f32 %v207, %v224
    %v230 = vadd.f32 %v208, %v222
    %s231 = sld [smem:[#allocation3 + $0x1c]]
    %v232 = vstv %s231
    %v233 = vmul.f32 %v232, %v72
    %v234 = vmul.f32 %v232, %v73
    %v235 = vmul.f32 %v232, 0.0
    %239 = vrot.lane.b32.xlu0 %v233, 64
    %v240 = vpop.permute.xlu0 %239
    %241 = vrot.lane.b32.xlu0 %v234, 64
    %v242 = vpop.permute.xlu0 %241
    %243 = vrot.lane.b32.xlu0 %v235, 64
    %v244 = vpop.permute.xlu0 %243
    %vm245 = vcmask 523264
    %v246 = vsel %vm245, %v240, %v242
    %v247 = vsel %vm245, %v242, %v244
    %v251 = vadd.f32 %v228, %v240
    %v252 = vadd.f32 %v229, %v246
    %v253 = vadd.f32 %v230, %v247
    %s254 = sld [smem:[#allocation3 + $0x4d]]
    %v255 = vstv %s254
    %v256 = vmul.f32 %v255, %v76
    %v257 = vmul.f32 %v255, %v77
    %v258 = vmul.f32 %v255, 0.0
    %262 = vrot.lane.b32.xlu0 %v256, 64
    %v263 = vpop.permute.xlu0 %262
    %264 = vrot.lane.b32.xlu0 %v257, 64
    %v265 = vpop.permute.xlu0 %264
    %266 = vrot.lane.b32.xlu0 %v258, 64
    %v267 = vpop.permute.xlu0 %266
    %v268 = vsel %vm245, %v263, %v265
    %v269 = vsel %vm245, %v265, %v267
    %v273 = vadd.f32 %v251, %v263
    %v274 = vadd.f32 %v252, %v268
    %v275 = vadd.f32 %v253, %v269
    %s276 = sld [smem:[#allocation3 + $0x23]]
    %v277 = vstv %s276
    %v278 = vmul.f32 %v277, %v72
    %v279 = vmul.f32 %v277, %v73
    %v280 = vmul.f32 %v277, 0.0
    %284 = vrot.lane.b32.xlu0 %v278, 48
    %v285 = vpop.permute.xlu0 %284
    %286 = vrot.lane.b32.xlu0 %v279, 48
    %v287 = vpop.permute.xlu0 %286
    %288 = vrot.lane.b32.xlu0 %v280, 48
    %v289 = vpop.permute.xlu0 %288
    %vm290 = vcmask 392192
    %v291 = vsel %vm290, %v285, %v287
    %v292 = vsel %vm290, %v287, %v289
    %v296 = vadd.f32 %v273, %v285
    %v297 = vadd.f32 %v274, %v291
    %v298 = vadd.f32 %v275, %v292
    %s299 = sld [smem:[#allocation3 + $0x54]]
    %v300 = vstv %s299
    %v301 = vmul.f32 %v300, %v76
    %v302 = vmul.f32 %v300, %v77
    %v303 = vmul.f32 %v300, 0.0
    %307 = vrot.lane.b32.xlu0 %v301, 48
    %v308 = vpop.permute.xlu0 %307
    %309 = vrot.lane.b32.xlu0 %v302, 48
    %v310 = vpop.permute.xlu0 %309
    %311 = vrot.lane.b32.xlu0 %v303, 48
    %v312 = vpop.permute.xlu0 %311
    %v313 = vsel %vm290, %v308, %v310
    %v314 = vsel %vm290, %v310, %v312
    %v318 = vadd.f32 %v296, %v308
    %v319 = vadd.f32 %v297, %v313
    %v320 = vadd.f32 %v298, %v314
    %s321 = sld [smem:[#allocation3 + $0x2a]]
    %v322 = vstv %s321
    %v323 = vmul.f32 %v322, %v72
    %v324 = vmul.f32 %v322, %v73
    %v325 = vmul.f32 %v322, 0.0
    %329 = vrot.lane.b32.xlu0 %v323, 32
    %v330 = vpop.permute.xlu0 %329
    %331 = vrot.lane.b32.xlu0 %v324, 32
    %v332 = vpop.permute.xlu0 %331
    %333 = vrot.lane.b32.xlu0 %v325, 32
    %v334 = vpop.permute.xlu0 %333
    %vm335 = vcmask 261120
    %v336 = vsel %vm335, %v330, %v332
    %v337 = vsel %vm335, %v332, %v334
    %v341 = vadd.f32 %v318, %v330
    %v342 = vadd.f32 %v319, %v336
    %v343 = vadd.f32 %v320, %v337
    %s344 = sld [smem:[#allocation3 + $0x5b]]
    %v345 = vstv %s344
    %v346 = vmul.f32 %v345, %v76
    %v347 = vmul.f32 %v345, %v77
    %v348 = vmul.f32 %v345, 0.0
    %352 = vrot.lane.b32.xlu0 %v346, 32
    %v353 = vpop.permute.xlu0 %352
    %354 = vrot.lane.b32.xlu0 %v347, 32
    %v355 = vpop.permute.xlu0 %354
    %356 = vrot.lane.b32.xlu0 %v348, 32
    %v357 = vpop.permute.xlu0 %356
    %v358 = vsel %vm335, %v353, %v355
    %v359 = vsel %vm335, %v355, %v357
    %v363 = vadd.f32 %v341, %v353
    %v364 = vadd.f32 %v342, %v358
    %v365 = vadd.f32 %v343, %v359
    %v366 = vld [vmem:[#allocation7] ss:$8 sm:$0x3]
    %v368 = vlaneseq
    %v369 = vshrl.u32 %v368, 7
    %v370 = vsub.s32 0, %v369
    %v371 = vrot.slane %v366, %v370
    %v372 = vlaneseq
    %v373 = vshrl.u32 %v372, 7
    %v374 = vsub.s32 1, %v373
    %v375 = vrot.slane %v366, %v374
    %381 = vrot.lane.b32.xlu0 %v363, 51
    %v382 = vpop.permute.xlu0 %381
    %383 = vrot.lane.b32.xlu0 %v364, 51
    %v384 = vpop.permute.xlu0 %383
    %385 = vrot.lane.b32.xlu0 %v365, 51
    %v386 = vpop.permute.xlu0 %385
    %vm387 = vcmask 416768
    %v388 = vsel %vm387, %v382, %v384
    %v389 = vsel %vm387, %v384, %v386
    %v392 = vmul.f32 %v371, %v388
    %v393 = vmul.f32 %v375, %v389
    %v394 = vadd.f32 %v79, %v392
    %v395 = vadd.f32 %v79, %v393
    %s396 = sld [smem:[#allocation3 + $0x1]]
    %v397 = vstv %s396
    %v398 = vmul.f32 %v397, 0.0
    %v399 = vmul.f32 %v397, %v72
    %v400 = vmul.f32 %v397, %v73
    %v401 = vadd.f32 %v398, 0.0
    %v402 = vadd.f32 %v399, 0.0
    %v403 = vadd.f32 %v400, 0.0
    %s404 = sld [smem:[#allocation3 + $0x32]]
    %v405 = vstv %s404
    %v406 = vmul.f32 %v405, 0.0
    %v407 = vmul.f32 %v405, %v76
    %v408 = vmul.f32 %v405, %v77
    %v409 = vadd.f32 %v401, %v406
    %v410 = vadd.f32 %v402, %v407
    %v411 = vadd.f32 %v403, %v408
    %s412 = sld [smem:[#allocation3 + $0x8]]
    %v413 = vstv %s412
    %v414 = vmul.f32 %v413, 0.0
    %v415 = vmul.f32 %v413, %v72
    %v416 = vmul.f32 %v413, %v73
    %420 = vrot.lane.b32.xlu0 %v414, 112
    %v421 = vpop.permute.xlu0 %420
    %422 = vrot.lane.b32.xlu0 %v415, 112
    %v423 = vpop.permute.xlu0 %422
    %424 = vrot.lane.b32.xlu0 %v416, 112
    %v425 = vpop.permute.xlu0 %424
    %v426 = vsel %vm110, %v421, %v423
    %v427 = vsel %vm110, %v423, %v425
    %v431 = vadd.f32 %v409, %v426
    %v432 = vadd.f32 %v410, %v427
    %v433 = vadd.f32 %v411, %v425
    %s434 = sld [smem:[#allocation3 + $0x39]]
    %v435 = vstv %s434
    %v436 = vmul.f32 %v435, 0.0
    %v437 = vmul.f32 %v435, %v76
    %v438 = vmul.f32 %v435, %v77
    %442 = vrot.lane.b32.xlu0 %v436, 112
    %v443 = vpop.permute.xlu0 %442
    %444 = vrot.lane.b32.xlu0 %v437, 112
    %v445 = vpop.permute.xlu0 %444
    %446 = vrot.lane.b32.xlu0 %v438, 112
    %v447 = vpop.permute.xlu0 %446
    %v448 = vsel %vm110, %v443, %v445
    %v449 = vsel %vm110, %v445, %v447
    %v453 = vadd.f32 %v431, %v448
    %v454 = vadd.f32 %v432, %v449
    %v455 = vadd.f32 %v433, %v447
    %s456 = sld [smem:[#allocation3 + $0xf]]
    %v457 = vstv %s456
    %v458 = vmul.f32 %v457, 0.0
    %v459 = vmul.f32 %v457, %v72
    %v460 = vmul.f32 %v457, %v73
    %464 = vrot.lane.b32.xlu0 %v458, 96
    %v465 = vpop.permute.xlu0 %464
    %466 = vrot.lane.b32.xlu0 %v459, 96
    %v467 = vpop.permute.xlu0 %466
    %468 = vrot.lane.b32.xlu0 %v460, 96
    %v469 = vpop.permute.xlu0 %468
    %v470 = vsel %vm155, %v465, %v467
    %v471 = vsel %vm155, %v467, %v469
    %v475 = vadd.f32 %v453, %v470
    %v476 = vadd.f32 %v454, %v471
    %v477 = vadd.f32 %v455, %v469
    %s478 = sld [smem:[#allocation3 + $0x40]]
    %v479 = vstv %s478
    %v480 = vmul.f32 %v479, 0.0
    %v481 = vmul.f32 %v479, %v76
    %v482 = vmul.f32 %v479, %v77
    %486 = vrot.lane.b32.xlu0 %v480, 96
    %v487 = vpop.permute.xlu0 %486
    %488 = vrot.lane.b32.xlu0 %v481, 96
    %v489 = vpop.permute.xlu0 %488
    %490 = vrot.lane.b32.xlu0 %v482, 96
    %v491 = vpop.permute.xlu0 %490
    %v492 = vsel %vm155, %v487, %v489
    %v493 = vsel %vm155, %v489, %v491
    %v497 = vadd.f32 %v475, %v492
    %v498 = vadd.f32 %v476, %v493
    %v499 = vadd.f32 %v477, %v491
    %s500 = sld [smem:[#allocation3 + $0x16]]
    %v501 = vstv %s500
    %v502 = vmul.f32 %v501, 0.0
    %v503 = vmul.f32 %v501, %v72
    %v504 = vmul.f32 %v501, %v73
    %508 = vrot.lane.b32.xlu0 %v502, 80
    %v509 = vpop.permute.xlu0 %508
    %510 = vrot.lane.b32.xlu0 %v503, 80
    %v511 = vpop.permute.xlu0 %510
    %512 = vrot.lane.b32.xlu0 %v504, 80
    %v513 = vpop.permute.xlu0 %512
    %v514 = vsel %vm200, %v509, %v511
    %v515 = vsel %vm200, %v511, %v513
    %v519 = vadd.f32 %v497, %v514
    %v520 = vadd.f32 %v498, %v515
    %v521 = vadd.f32 %v499, %v513
    %s522 = sld [smem:[#allocation3 + $0x47]]
    %v523 = vstv %s522
    %v524 = vmul.f32 %v523, 0.0
    %v525 = vmul.f32 %v523, %v76
    %v526 = vmul.f32 %v523, %v77
    %530 = vrot.lane.b32.xlu0 %v524, 80
    %v531 = vpop.permute.xlu0 %530
    %532 = vrot.lane.b32.xlu0 %v525, 80
    %v533 = vpop.permute.xlu0 %532
    %534 = vrot.lane.b32.xlu0 %v526, 80
    %v535 = vpop.permute.xlu0 %534
    %v536 = vsel %vm200, %v531, %v533
    %v537 = vsel %vm200, %v533, %v535
    %v541 = vadd.f32 %v519, %v536
    %v542 = vadd.f32 %v520, %v537
    %v543 = vadd.f32 %v521, %v535
    %s544 = sld [smem:[#allocation3 + $0x1d]]
    %v545 = vstv %s544
    %v546 = vmul.f32 %v545, %v72
    %v547 = vmul.f32 %v545, %v73
    %v548 = vmul.f32 %v545, 0.0
    %552 = vrot.lane.b32.xlu0 %v546, 64
    %v553 = vpop.permute.xlu0 %552
    %554 = vrot.lane.b32.xlu0 %v547, 64
    %v555 = vpop.permute.xlu0 %554
    %556 = vrot.lane.b32.xlu0 %v548, 64
    %v557 = vpop.permute.xlu0 %556
    %v558 = vsel %vm245, %v553, %v555
    %v559 = vsel %vm245, %v555, %v557
    %v563 = vadd.f32 %v541, %v553
    %v564 = vadd.f32 %v542, %v558
    %v565 = vadd.f32 %v543, %v559
    %s566 = sld [smem:[#allocation3 + $0x4e]]
    %v567 = vstv %s566
    %v568 = vmul.f32 %v567, %v76
    %v569 = vmul.f32 %v567, %v77
    %v570 = vmul.f32 %v567, 0.0
    %574 = vrot.lane.b32.xlu0 %v568, 64
    %v575 = vpop.permute.xlu0 %574
    %576 = vrot.lane.b32.xlu0 %v569, 64
    %v577 = vpop.permute.xlu0 %576
    %578 = vrot.lane.b32.xlu0 %v570, 64
    %v579 = vpop.permute.xlu0 %578
    %v580 = vsel %vm245, %v575, %v577
    %v581 = vsel %vm245, %v577, %v579
    %v585 = vadd.f32 %v563, %v575
    %v586 = vadd.f32 %v564, %v580
    %v587 = vadd.f32 %v565, %v581
    %s588 = sld [smem:[#allocation3 + $0x24]]
    %v589 = vstv %s588
    %v590 = vmul.f32 %v589, %v72
    %v591 = vmul.f32 %v589, %v73
    %v592 = vmul.f32 %v589, 0.0
    %596 = vrot.lane.b32.xlu0 %v590, 48
    %v597 = vpop.permute.xlu0 %596
    %598 = vrot.lane.b32.xlu0 %v591, 48
    %v599 = vpop.permute.xlu0 %598
    %600 = vrot.lane.b32.xlu0 %v592, 48
    %v601 = vpop.permute.xlu0 %600
    %v602 = vsel %vm290, %v597, %v599
    %v603 = vsel %vm290, %v599, %v601
    %v607 = vadd.f32 %v585, %v597
    %v608 = vadd.f32 %v586, %v602
    %v609 = vadd.f32 %v587, %v603
    %s610 = sld [smem:[#allocation3 + $0x55]]
    %v611 = vstv %s610
    %v612 = vmul.f32 %v611, %v76
    %v613 = vmul.f32 %v611, %v77
    %v614 = vmul.f32 %v611, 0.0
    %618 = vrot.lane.b32.xlu0 %v612, 48
    %v619 = vpop.permute.xlu0 %618
    %620 = vrot.lane.b32.xlu0 %v613, 48
    %v621 = vpop.permute.xlu0 %620
    %622 = vrot.lane.b32.xlu0 %v614, 48
    %v623 = vpop.permute.xlu0 %622
    %v624 = vsel %vm290, %v619, %v621
    %v625 = vsel %vm290, %v621, %v623
    %v629 = vadd.f32 %v607, %v619
    %v630 = vadd.f32 %v608, %v624
    %v631 = vadd.f32 %v609, %v625
    %s632 = sld [smem:[#allocation3 + $0x2b]]
    %v633 = vstv %s632
    %v634 = vmul.f32 %v633, %v72
    %v635 = vmul.f32 %v633, %v73
    %v636 = vmul.f32 %v633, 0.0
    %640 = vrot.lane.b32.xlu0 %v634, 32
    %v641 = vpop.permute.xlu0 %640
    %642 = vrot.lane.b32.xlu0 %v635, 32
    %v643 = vpop.permute.xlu0 %642
    %644 = vrot.lane.b32.xlu0 %v636, 32
    %v645 = vpop.permute.xlu0 %644
    %v646 = vsel %vm335, %v641, %v643
    %v647 = vsel %vm335, %v643, %v645
    %v651 = vadd.f32 %v629, %v641
    %v652 = vadd.f32 %v630, %v646
    %v653 = vadd.f32 %v631, %v647
    %s654 = sld [smem:[#allocation3 + $0x5c]]
    %v655 = vstv %s654
    %v656 = vmul.f32 %v655, %v76
    %v657 = vmul.f32 %v655, %v77
    %v658 = vmul.f32 %v655, 0.0
    %662 = vrot.lane.b32.xlu0 %v656, 32
    %v663 = vpop.permute.xlu0 %662
    %664 = vrot.lane.b32.xlu0 %v657, 32
    %v665 = vpop.permute.xlu0 %664
    %666 = vrot.lane.b32.xlu0 %v658, 32
    %v667 = vpop.permute.xlu0 %666
    %v668 = vsel %vm335, %v663, %v665
    %v669 = vsel %vm335, %v665, %v667
    %v673 = vadd.f32 %v651, %v663
    %v674 = vadd.f32 %v652, %v668
    %v675 = vadd.f32 %v653, %v669
    %s676 = scalar_lea.vmem [#allocation7], 1
    %v677 = vld [vmem:[%s676] ss:$8 sm:$0x3]
    %v679 = vlaneseq
    %v680 = vshrl.u32 %v679, 7
    %v681 = vsub.s32 0, %v680
    %v682 = vrot.slane %v677, %v681
    %v683 = vlaneseq
    %v684 = vshrl.u32 %v683, 7
    %v685 = vsub.s32 1, %v684
    %v686 = vrot.slane %v677, %v685
    %692 = vrot.lane.b32.xlu0 %v673, 50
    %v693 = vpop.permute.xlu0 %692
    %694 = vrot.lane.b32.xlu0 %v674, 50
    %v695 = vpop.permute.xlu0 %694
    %696 = vrot.lane.b32.xlu0 %v675, 50
    %v697 = vpop.permute.xlu0 %696
    %vm698 = vcmask 408576
    %v699 = vsel %vm698, %v693, %v695
    %v700 = vsel %vm698, %v695, %v697
    %v703 = vmul.f32 %v682, %v699
    %v704 = vmul.f32 %v686, %v700
    %v705 = vadd.f32 %v394, %v703
    %v706 = vadd.f32 %v395, %v704
    %s707 = sld [smem:[#allocation3 + $0x2]]
    %v708 = vstv %s707
    %v709 = vmul.f32 %v708, 0.0
    %v710 = vmul.f32 %v708, %v72
    %v711 = vmul.f32 %v708, %v73
    %v712 = vadd.f32 %v709, 0.0
    %v713 = vadd.f32 %v710, 0.0
    %v714 = vadd.f32 %v711, 0.0
    %s715 = sld [smem:[#allocation3 + $0x33]]
    %v716 = vstv %s715
    %v717 = vmul.f32 %v716, 0.0
    %v718 = vmul.f32 %v716, %v76
    %v719 = vmul.f32 %v716, %v77
    %v720 = vadd.f32 %v712, %v717
    %v721 = vadd.f32 %v713, %v718
    %v722 = vadd.f32 %v714, %v719
    %s723 = sld [smem:[#allocation3 + $0x9]]
    %v724 = vstv %s723
    %v725 = vmul.f32 %v724, 0.0
    %v726 = vmul.f32 %v724, %v72
    %v727 = vmul.f32 %v724, %v73
    %731 = vrot.lane.b32.xlu0 %v725, 112
    %v732 = vpop.permute.xlu0 %731
    %733 = vrot.lane.b32.xlu0 %v726, 112
    %v734 = vpop.permute.xlu0 %733
    %735 = vrot.lane.b32.xlu0 %v727, 112
    %v736 = vpop.permute.xlu0 %735
    %v737 = vsel %vm110, %v732, %v734
    %v738 = vsel %vm110, %v734, %v736
    %v742 = vadd.f32 %v720, %v737
    %v743 = vadd.f32 %v721, %v738
    %v744 = vadd.f32 %v722, %v736
    %s745 = sld [smem:[#allocation3 + $0x3a]]
    %v746 = vstv %s745
    %v747 = vmul.f32 %v746, 0.0
    %v748 = vmul.f32 %v746, %v76
    %v749 = vmul.f32 %v746, %v77
    %753 = vrot.lane.b32.xlu0 %v747, 112
    %v754 = vpop.permute.xlu0 %753
    %755 = vrot.lane.b32.xlu0 %v748, 112
    %v756 = vpop.permute.xlu0 %755
    %757 = vrot.lane.b32.xlu0 %v749, 112
    %v758 = vpop.permute.xlu0 %757
    %v759 = vsel %vm110, %v754, %v756
    %v760 = vsel %vm110, %v756, %v758
    %v764 = vadd.f32 %v742, %v759
    %v765 = vadd.f32 %v743, %v760
    %v766 = vadd.f32 %v744, %v758
    %s767 = sld [smem:[#allocation3 + $0x10]]
    %v768 = vstv %s767
    %v769 = vmul.f32 %v768, 0.0
    %v770 = vmul.f32 %v768, %v72
    %v771 = vmul.f32 %v768, %v73
    %775 = vrot.lane.b32.xlu0 %v769, 96
    %v776 = vpop.permute.xlu0 %775
    %777 = vrot.lane.b32.xlu0 %v770, 96
    %v778 = vpop.permute.xlu0 %777
    %779 = vrot.lane.b32.xlu0 %v771, 96
    %v780 = vpop.permute.xlu0 %779
    %v781 = vsel %vm155, %v776, %v778
    %v782 = vsel %vm155, %v778, %v780
    %v786 = vadd.f32 %v764, %v781
    %v787 = vadd.f32 %v765, %v782
    %v788 = vadd.f32 %v766, %v780
    %s789 = sld [smem:[#allocation3 + $0x41]]
    %v790 = vstv %s789
    %v791 = vmul.f32 %v790, 0.0
    %v792 = vmul.f32 %v790, %v76
    %v793 = vmul.f32 %v790, %v77
    %797 = vrot.lane.b32.xlu0 %v791, 96
    %v798 = vpop.permute.xlu0 %797
    %799 = vrot.lane.b32.xlu0 %v792, 96
    %v800 = vpop.permute.xlu0 %799
    %801 = vrot.lane.b32.xlu0 %v793, 96
    %v802 = vpop.permute.xlu0 %801
    %v803 = vsel %vm155, %v798, %v800
    %v804 = vsel %vm155, %v800, %v802
    %v808 = vadd.f32 %v786, %v803
    %v809 = vadd.f32 %v787, %v804
    %v810 = vadd.f32 %v788, %v802
    %s811 = sld [smem:[#allocation3 + $0x17]]
    %v812 = vstv %s811
    %v813 = vmul.f32 %v812, 0.0
    %v814 = vmul.f32 %v812, %v72
    %v815 = vmul.f32 %v812, %v73
    %819 = vrot.lane.b32.xlu0 %v813, 80
    %v820 = vpop.permute.xlu0 %819
    %821 = vrot.lane.b32.xlu0 %v814, 80
    %v822 = vpop.permute.xlu0 %821
    %823 = vrot.lane.b32.xlu0 %v815, 80
    %v824 = vpop.permute.xlu0 %823
    %v825 = vsel %vm200, %v820, %v822
    %v826 = vsel %vm200, %v822, %v824
    %v830 = vadd.f32 %v808, %v825
    %v831 = vadd.f32 %v809, %v826
    %v832 = vadd.f32 %v810, %v824
    %s833 = sld [smem:[#allocation3 + $0x48]]
    %v834 = vstv %s833
    %v835 = vmul.f32 %v834, 0.0
    %v836 = vmul.f32 %v834, %v76
    %v837 = vmul.f32 %v834, %v77
    %841 = vrot.lane.b32.xlu0 %v835, 80
    %v842 = vpop.permute.xlu0 %841
    %843 = vrot.lane.b32.xlu0 %v836, 80
    %v844 = vpop.permute.xlu0 %843
    %845 = vrot.lane.b32.xlu0 %v837, 80
    %v846 = vpop.permute.xlu0 %845
    %v847 = vsel %vm200, %v842, %v844
    %v848 = vsel %vm200, %v844, %v846
    %v852 = vadd.f32 %v830, %v847
    %v853 = vadd.f32 %v831, %v848
    %v854 = vadd.f32 %v832, %v846
    %s855 = sld [smem:[#allocation3 + $0x1e]]
    %v856 = vstv %s855
    %v857 = vmul.f32 %v856, %v72
    %v858 = vmul.f32 %v856, %v73
    %v859 = vmul.f32 %v856, 0.0
    %863 = vrot.lane.b32.xlu0 %v857, 64
    %v864 = vpop.permute.xlu0 %863
    %865 = vrot.lane.b32.xlu0 %v858, 64
    %v866 = vpop.permute.xlu0 %865
    %867 = vrot.lane.b32.xlu0 %v859, 64
    %v868 = vpop.permute.xlu0 %867
    %v869 = vsel %vm245, %v864, %v866
    %v870 = vsel %vm245, %v866, %v868
    %v874 = vadd.f32 %v852, %v864
    %v875 = vadd.f32 %v853, %v869
    %v876 = vadd.f32 %v854, %v870
    %s877 = sld [smem:[#allocation3 + $0x4f]]
    %v878 = vstv %s877
    %v879 = vmul.f32 %v878, %v76
    %v880 = vmul.f32 %v878, %v77
    %v881 = vmul.f32 %v878, 0.0
    %885 = vrot.lane.b32.xlu0 %v879, 64
    %v886 = vpop.permute.xlu0 %885
    %887 = vrot.lane.b32.xlu0 %v880, 64
    %v888 = vpop.permute.xlu0 %887
    %889 = vrot.lane.b32.xlu0 %v881, 64
    %v890 = vpop.permute.xlu0 %889
    %v891 = vsel %vm245, %v886, %v888
    %v892 = vsel %vm245, %v888, %v890
    %v896 = vadd.f32 %v874, %v886
    %v897 = vadd.f32 %v875, %v891
    %v898 = vadd.f32 %v876, %v892
    %s899 = sld [smem:[#allocation3 + $0x25]]
    %v900 = vstv %s899
    %v901 = vmul.f32 %v900, %v72
    %v902 = vmul.f32 %v900, %v73
    %v903 = vmul.f32 %v900, 0.0
    %907 = vrot.lane.b32.xlu0 %v901, 48
    %v908 = vpop.permute.xlu0 %907
    %909 = vrot.lane.b32.xlu0 %v902, 48
    %v910 = vpop.permute.xlu0 %909
    %911 = vrot.lane.b32.xlu0 %v903, 48
    %v912 = vpop.permute.xlu0 %911
    %v913 = vsel %vm290, %v908, %v910
    %v914 = vsel %vm290, %v910, %v912
    %v918 = vadd.f32 %v896, %v908
    %v919 = vadd.f32 %v897, %v913
    %v920 = vadd.f32 %v898, %v914
    %s921 = sld [smem:[#allocation3 + $0x56]]
    %v922 = vstv %s921
    %v923 = vmul.f32 %v922, %v76
    %v924 = vmul.f32 %v922, %v77
    %v925 = vmul.f32 %v922, 0.0
    %929 = vrot.lane.b32.xlu0 %v923, 48
    %v930 = vpop.permute.xlu0 %929
    %931 = vrot.lane.b32.xlu0 %v924, 48
    %v932 = vpop.permute.xlu0 %931
    %933 = vrot.lane.b32.xlu0 %v925, 48
    %v934 = vpop.permute.xlu0 %933
    %v935 = vsel %vm290, %v930, %v932
    %v936 = vsel %vm290, %v932, %v934
    %v940 = vadd.f32 %v918, %v930
    %v941 = vadd.f32 %v919, %v935
    %v942 = vadd.f32 %v920, %v936
    %s943 = sld [smem:[#allocation3 + $0x2c]]
    %v944 = vstv %s943
    %v945 = vmul.f32 %v944, %v72
    %v946 = vmul.f32 %v944, %v73
    %v947 = vmul.f32 %v944, 0.0
    %951 = vrot.lane.b32.xlu0 %v945, 32
    %v952 = vpop.permute.xlu0 %951
    %953 = vrot.lane.b32.xlu0 %v946, 32
    %v954 = vpop.permute.xlu0 %953
    %955 = vrot.lane.b32.xlu0 %v947, 32
    %v956 = vpop.permute.xlu0 %955
    %v957 = vsel %vm335, %v952, %v954
    %v958 = vsel %vm335, %v954, %v956
    %v962 = vadd.f32 %v940, %v952
    %v963 = vadd.f32 %v941, %v957
    %v964 = vadd.f32 %v942, %v958
    %s965 = sld [smem:[#allocation3 + $0x5d]]
    %v966 = vstv %s965
    %v967 = vmul.f32 %v966, %v76
    %v968 = vmul.f32 %v966, %v77
    %v969 = vmul.f32 %v966, 0.0
    %973 = vrot.lane.b32.xlu0 %v967, 32
    %v974 = vpop.permute.xlu0 %973
    %975 = vrot.lane.b32.xlu0 %v968, 32
    %v976 = vpop.permute.xlu0 %975
    %977 = vrot.lane.b32.xlu0 %v969, 32
    %v978 = vpop.permute.xlu0 %977
    %v979 = vsel %vm335, %v974, %v976
    %v980 = vsel %vm335, %v976, %v978
    %v984 = vadd.f32 %v962, %v974
    %v985 = vadd.f32 %v963, %v979
    %v986 = vadd.f32 %v964, %v980
    %s987 = scalar_lea.vmem [#allocation7], 2
    %v988 = vld [vmem:[%s987] ss:$8 sm:$0x3]
    %v990 = vlaneseq
    %v991 = vshrl.u32 %v990, 7
    %v992 = vsub.s32 0, %v991
    %v993 = vrot.slane %v988, %v992
    %v994 = vlaneseq
    %v995 = vshrl.u32 %v994, 7
    %v996 = vsub.s32 1, %v995
    %v997 = vrot.slane %v988, %v996
    %1003 = vrot.lane.b32.xlu0 %v984, 49
    %v1004 = vpop.permute.xlu0 %1003
    %1005 = vrot.lane.b32.xlu0 %v985, 49
    %v1006 = vpop.permute.xlu0 %1005
    %1007 = vrot.lane.b32.xlu0 %v986, 49
    %v1008 = vpop.permute.xlu0 %1007
    %vm1009 = vcmask 400384
    %v1010 = vsel %vm1009, %v1004, %v1006
    %v1011 = vsel %vm1009, %v1006, %v1008
    %v1014 = vmul.f32 %v993, %v1010
    %v1015 = vmul.f32 %v997, %v1011
    %v1016 = vadd.f32 %v705, %v1014
    %v1017 = vadd.f32 %v706, %v1015
    %s1018 = sld [smem:[#allocation3 + $0x3]]
    %v1019 = vstv %s1018
    %v1020 = vmul.f32 %v1019, 0.0
    %v1021 = vmul.f32 %v1019, %v72
    %v1022 = vmul.f32 %v1019, %v73
    %v1023 = vadd.f32 %v1020, 0.0
    %v1024 = vadd.f32 %v1021, 0.0
    %v1025 = vadd.f32 %v1022, 0.0
    %s1026 = sld [smem:[#allocation3 + $0x34]]
    %v1027 = vstv %s1026
    %v1028 = vmul.f32 %v1027, 0.0
    %v1029 = vmul.f32 %v1027, %v76
    %v1030 = vmul.f32 %v1027, %v77
    %v1031 = vadd.f32 %v1023, %v1028
    %v1032 = vadd.f32 %v1024, %v1029
    %v1033 = vadd.f32 %v1025, %v1030
    %s1034 = sld [smem:[#allocation3 + $0xa]]
    %v1035 = vstv %s1034
    %v1036 = vmul.f32 %v1035, 0.0
    %v1037 = vmul.f32 %v1035, %v72
    %v1038 = vmul.f32 %v1035, %v73
    %1042 = vrot.lane.b32.xlu0 %v1036, 112
    %v1043 = vpop.permute.xlu0 %1042
    %1044 = vrot.lane.b32.xlu0 %v1037, 112
    %v1045 = vpop.permute.xlu0 %1044
    %1046 = vrot.lane.b32.xlu0 %v1038, 112
    %v1047 = vpop.permute.xlu0 %1046
    %v1048 = vsel %vm110, %v1043, %v1045
    %v1049 = vsel %vm110, %v1045, %v1047
    %v1053 = vadd.f32 %v1031, %v1048
    %v1054 = vadd.f32 %v1032, %v1049
    %v1055 = vadd.f32 %v1033, %v1047
    %s1056 = sld [smem:[#allocation3 + $0x3b]]
    %v1057 = vstv %s1056
    %v1058 = vmul.f32 %v1057, 0.0
    %v1059 = vmul.f32 %v1057, %v76
    %v1060 = vmul.f32 %v1057, %v77
    %1064 = vrot.lane.b32.xlu0 %v1058, 112
    %v1065 = vpop.permute.xlu0 %1064
    %1066 = vrot.lane.b32.xlu0 %v1059, 112
    %v1067 = vpop.permute.xlu0 %1066
    %1068 = vrot.lane.b32.xlu0 %v1060, 112
    %v1069 = vpop.permute.xlu0 %1068
    %v1070 = vsel %vm110, %v1065, %v1067
    %v1071 = vsel %vm110, %v1067, %v1069
    %v1075 = vadd.f32 %v1053, %v1070
    %v1076 = vadd.f32 %v1054, %v1071
    %v1077 = vadd.f32 %v1055, %v1069
    %s1078 = sld [smem:[#allocation3 + $0x11]]
    %v1079 = vstv %s1078
    %v1080 = vmul.f32 %v1079, 0.0
    %v1081 = vmul.f32 %v1079, %v72
    %v1082 = vmul.f32 %v1079, %v73
    %1086 = vrot.lane.b32.xlu0 %v1080, 96
    %v1087 = vpop.permute.xlu0 %1086
    %1088 = vrot.lane.b32.xlu0 %v1081, 96
    %v1089 = vpop.permute.xlu0 %1088
    %1090 = vrot.lane.b32.xlu0 %v1082, 96
    %v1091 = vpop.permute.xlu0 %1090
    %v1092 = vsel %vm155, %v1087, %v1089
    %v1093 = vsel %vm155, %v1089, %v1091
    %v1097 = vadd.f32 %v1075, %v1092
    %v1098 = vadd.f32 %v1076, %v1093
    %v1099 = vadd.f32 %v1077, %v1091
    %s1100 = sld [smem:[#allocation3 + $0x42]]
    %v1101 = vstv %s1100
    %v1102 = vmul.f32 %v1101, 0.0
    %v1103 = vmul.f32 %v1101, %v76
    %v1104 = vmul.f32 %v1101, %v77
    %1108 = vrot.lane.b32.xlu0 %v1102, 96
    %v1109 = vpop.permute.xlu0 %1108
    %1110 = vrot.lane.b32.xlu0 %v1103, 96
    %v1111 = vpop.permute.xlu0 %1110
    %1112 = vrot.lane.b32.xlu0 %v1104, 96
    %v1113 = vpop.permute.xlu0 %1112
    %v1114 = vsel %vm155, %v1109, %v1111
    %v1115 = vsel %vm155, %v1111, %v1113
    %v1119 = vadd.f32 %v1097, %v1114
    %v1120 = vadd.f32 %v1098, %v1115
    %v1121 = vadd.f32 %v1099, %v1113
    %s1122 = sld [smem:[#allocation3 + $0x18]]
    %v1123 = vstv %s1122
    %v1124 = vmul.f32 %v1123, %v72
    %v1125 = vmul.f32 %v1123, %v73
    %1128 = vrot.lane.b32.xlu0 %v1124, 80
    %v1129 = vpop.permute.xlu0 %1128
    %1130 = vrot.lane.b32.xlu0 %v1125, 80
    %v1131 = vpop.permute.xlu0 %1130
    %v1132 = vsel %vm200, %v1129, %v1131
    %v1136 = vadd.f32 %v1119, %v1129
    %v1137 = vadd.f32 %v1120, %v1132
    %v1138 = vadd.f32 %v1121, %v1131
    %s1139 = sld [smem:[#allocation3 + $0x49]]
    %v1140 = vstv %s1139
    %v1141 = vmul.f32 %v1140, %v76
    %v1142 = vmul.f32 %v1140, %v77
    %1145 = vrot.lane.b32.xlu0 %v1141, 80
    %v1146 = vpop.permute.xlu0 %1145
    %1147 = vrot.lane.b32.xlu0 %v1142, 80
    %v1148 = vpop.permute.xlu0 %1147
    %v1149 = vsel %vm200, %v1146, %v1148
    %v1153 = vadd.f32 %v1136, %v1146
    %v1154 = vadd.f32 %v1137, %v1149
    %v1155 = vadd.f32 %v1138, %v1148
    %s1156 = sld [smem:[#allocation3 + $0x1f]]
    %v1157 = vstv %s1156
    %v1158 = vmul.f32 %v1157, %v72
    %v1159 = vmul.f32 %v1157, %v73
    %v1160 = vmul.f32 %v1157, 0.0
    %1164 = vrot.lane.b32.xlu0 %v1158, 64
    %v1165 = vpop.permute.xlu0 %1164
    %1166 = vrot.lane.b32.xlu0 %v1159, 64
    %v1167 = vpop.permute.xlu0 %1166
    %1168 = vrot.lane.b32.xlu0 %v1160, 64
    %v1169 = vpop.permute.xlu0 %1168
    %v1170 = vsel %vm245, %v1165, %v1167
    %v1171 = vsel %vm245, %v1167, %v1169
    %v1175 = vadd.f32 %v1153, %v1165
    %v1176 = vadd.f32 %v1154, %v1170
    %v1177 = vadd.f32 %v1155, %v1171
    %s1178 = sld [smem:[#allocation3 + $0x50]]
    %v1179 = vstv %s1178
    %v1180 = vmul.f32 %v1179, %v76
    %v1181 = vmul.f32 %v1179, %v77
    %v1182 = vmul.f32 %v1179, 0.0
    %1186 = vrot.lane.b32.xlu0 %v1180, 64
    %v1187 = vpop.permute.xlu0 %1186
    %1188 = vrot.lane.b32.xlu0 %v1181, 64
    %v1189 = vpop.permute.xlu0 %1188
    %1190 = vrot.lane.b32.xlu0 %v1182, 64
    %v1191 = vpop.permute.xlu0 %1190
    %v1192 = vsel %vm245, %v1187, %v1189
    %v1193 = vsel %vm245, %v1189, %v1191
    %v1197 = vadd.f32 %v1175, %v1187
    %v1198 = vadd.f32 %v1176, %v1192
    %v1199 = vadd.f32 %v1177, %v1193
    %s1200 = sld [smem:[#allocation3 + $0x26]]
    %v1201 = vstv %s1200
    %v1202 = vmul.f32 %v1201, %v72
    %v1203 = vmul.f32 %v1201, %v73
    %v1204 = vmul.f32 %v1201, 0.0
    %1208 = vrot.lane.b32.xlu0 %v1202, 48
    %v1209 = vpop.permute.xlu0 %1208
    %1210 = vrot.lane.b32.xlu0 %v1203, 48
    %v1211 = vpop.permute.xlu0 %1210
    %1212 = vrot.lane.b32.xlu0 %v1204, 48
    %v1213 = vpop.permute.xlu0 %1212
    %v1214 = vsel %vm290, %v1209, %v1211
    %v1215 = vsel %vm290, %v1211, %v1213
    %v1219 = vadd.f32 %v1197, %v1209
    %v1220 = vadd.f32 %v1198, %v1214
    %v1221 = vadd.f32 %v1199, %v1215
    %s1222 = sld [smem:[#allocation3 + $0x57]]
    %v1223 = vstv %s1222
    %v1224 = vmul.f32 %v1223, %v76
    %v1225 = vmul.f32 %v1223, %v77
    %v1226 = vmul.f32 %v1223, 0.0
    %1230 = vrot.lane.b32.xlu0 %v1224, 48
    %v1231 = vpop.permute.xlu0 %1230
    %1232 = vrot.lane.b32.xlu0 %v1225, 48
    %v1233 = vpop.permute.xlu0 %1232
    %1234 = vrot.lane.b32.xlu0 %v1226, 48
    %v1235 = vpop.permute.xlu0 %1234
    %v1236 = vsel %vm290, %v1231, %v1233
    %v1237 = vsel %vm290, %v1233, %v1235
    %v1241 = vadd.f32 %v1219, %v1231
    %v1242 = vadd.f32 %v1220, %v1236
    %v1243 = vadd.f32 %v1221, %v1237
    %s1244 = sld [smem:[#allocation3 + $0x2d]]
    %v1245 = vstv %s1244
    %v1246 = vmul.f32 %v1245, %v72
    %v1247 = vmul.f32 %v1245, %v73
    %v1248 = vmul.f32 %v1245, 0.0
    %1252 = vrot.lane.b32.xlu0 %v1246, 32
    %v1253 = vpop.permute.xlu0 %1252
    %1254 = vrot.lane.b32.xlu0 %v1247, 32
    %v1255 = vpop.permute.xlu0 %1254
    %1256 = vrot.lane.b32.xlu0 %v1248, 32
    %v1257 = vpop.permute.xlu0 %1256
    %v1258 = vsel %vm335, %v1253, %v1255
    %v1259 = vsel %vm335, %v1255, %v1257
    %v1263 = vadd.f32 %v1241, %v1253
    %v1264 = vadd.f32 %v1242, %v1258
    %v1265 = vadd.f32 %v1243, %v1259
    %s1266 = sld [smem:[#allocation3 + $0x5e]]
    %v1267 = vstv %s1266
    %v1268 = vmul.f32 %v1267, %v76
    %v1269 = vmul.f32 %v1267, %v77
    %v1270 = vmul.f32 %v1267, 0.0
    %1274 = vrot.lane.b32.xlu0 %v1268, 32
    %v1275 = vpop.permute.xlu0 %1274
    %1276 = vrot.lane.b32.xlu0 %v1269, 32
    %v1277 = vpop.permute.xlu0 %1276
    %1278 = vrot.lane.b32.xlu0 %v1270, 32
    %v1279 = vpop.permute.xlu0 %1278
    %v1280 = vsel %vm335, %v1275, %v1277
    %v1281 = vsel %vm335, %v1277, %v1279
    %v1285 = vadd.f32 %v1263, %v1275
    %v1286 = vadd.f32 %v1264, %v1280
    %v1287 = vadd.f32 %v1265, %v1281
    %1291 = vrot.lane.b32.xlu0 %v1285, 48
    %v1292 = vpop.permute.xlu0 %1291
    %1293 = vrot.lane.b32.xlu0 %v1286, 48
    %v1294 = vpop.permute.xlu0 %1293
    %1295 = vrot.lane.b32.xlu0 %v1287, 48
    %v1296 = vpop.permute.xlu0 %1295
    %v1297 = vsel %vm290, %v1292, %v1294
    %v1298 = vsel %vm290, %v1294, %v1296
    %v1301 = vadd.f32 %v1016, %v1297
    %v1302 = vadd.f32 %v1017, %v1298
    %s1303 = sld [smem:[#allocation3 + $0x4]]
    %v1304 = vstv %s1303
    %v1305 = vmul.f32 %v1304, 0.0
    %v1306 = vmul.f32 %v1304, %v72
    %v1307 = vmul.f32 %v1304, %v73
    %v1308 = vadd.f32 %v1305, 0.0
    %v1309 = vadd.f32 %v1306, 0.0
    %v1310 = vadd.f32 %v1307, 0.0
    %s1311 = sld [smem:[#allocation3 + $0x35]]
    %v1312 = vstv %s1311
    %v1313 = vmul.f32 %v1312, 0.0
    %v1314 = vmul.f32 %v1312, %v76
    %v1315 = vmul.f32 %v1312, %v77
    %v1316 = vadd.f32 %v1308, %v1313
    %v1317 = vadd.f32 %v1309, %v1314
    %v1318 = vadd.f32 %v1310, %v1315
    %s1319 = sld [smem:[#allocation3 + $0xb]]
    %v1320 = vstv %s1319
    %v1321 = vmul.f32 %v1320, 0.0
    %v1322 = vmul.f32 %v1320, %v72
    %v1323 = vmul.f32 %v1320, %v73
    %1327 = vrot.lane.b32.xlu0 %v1321, 112
    %v1328 = vpop.permute.xlu0 %1327
    %1329 = vrot.lane.b32.xlu0 %v1322, 112
    %v1330 = vpop.permute.xlu0 %1329
    %1331 = vrot.lane.b32.xlu0 %v1323, 112
    %v1332 = vpop.permute.xlu0 %1331
    %v1333 = vsel %vm110, %v1328, %v1330
    %v1334 = vsel %vm110, %v1330, %v1332
    %v1338 = vadd.f32 %v1316, %v1333
    %v1339 = vadd.f32 %v1317, %v1334
    %v1340 = vadd.f32 %v1318, %v1332
    %s1341 = sld [smem:[#allocation3 + $0x3c]]
    %v1342 = vstv %s1341
    %v1343 = vmul.f32 %v1342, 0.0
    %v1344 = vmul.f32 %v1342, %v76
    %v1345 = vmul.f32 %v1342, %v77
    %1349 = vrot.lane.b32.xlu0 %v1343, 112
    %v1350 = vpop.permute.xlu0 %1349
    %1351 = vrot.lane.b32.xlu0 %v1344, 112
    %v1352 = vpop.permute.xlu0 %1351
    %1353 = vrot.lane.b32.xlu0 %v1345, 112
    %v1354 = vpop.permute.xlu0 %1353
    %v1355 = vsel %vm110, %v1350, %v1352
    %v1356 = vsel %vm110, %v1352, %v1354
    %v1360 = vadd.f32 %v1338, %v1355
    %v1361 = vadd.f32 %v1339, %v1356
    %v1362 = vadd.f32 %v1340, %v1354
    %s1363 = sld [smem:[#allocation3 + $0x12]]
    %v1364 = vstv %s1363
    %v1365 = vmul.f32 %v1364, 0.0
    %v1366 = vmul.f32 %v1364, %v72
    %v1367 = vmul.f32 %v1364, %v73
    %1371 = vrot.lane.b32.xlu0 %v1365, 96
    %v1372 = vpop.permute.xlu0 %1371
    %1373 = vrot.lane.b32.xlu0 %v1366, 96
    %v1374 = vpop.permute.xlu0 %1373
    %1375 = vrot.lane.b32.xlu0 %v1367, 96
    %v1376 = vpop.permute.xlu0 %1375
    %v1377 = vsel %vm155, %v1372, %v1374
    %v1378 = vsel %vm155, %v1374, %v1376
    %v1382 = vadd.f32 %v1360, %v1377
    %v1383 = vadd.f32 %v1361, %v1378
    %v1384 = vadd.f32 %v1362, %v1376
    %s1385 = sld [smem:[#allocation3 + $0x43]]
    %v1386 = vstv %s1385
    %v1387 = vmul.f32 %v1386, 0.0
    %v1388 = vmul.f32 %v1386, %v76
    %v1389 = vmul.f32 %v1386, %v77
    %1393 = vrot.lane.b32.xlu0 %v1387, 96
    %v1394 = vpop.permute.xlu0 %1393
    %1395 = vrot.lane.b32.xlu0 %v1388, 96
    %v1396 = vpop.permute.xlu0 %1395
    %1397 = vrot.lane.b32.xlu0 %v1389, 96
    %v1398 = vpop.permute.xlu0 %1397
    %v1399 = vsel %vm155, %v1394, %v1396
    %v1400 = vsel %vm155, %v1396, %v1398
    %v1404 = vadd.f32 %v1382, %v1399
    %v1405 = vadd.f32 %v1383, %v1400
    %v1406 = vadd.f32 %v1384, %v1398
    %s1407 = sld [smem:[#allocation3 + $0x19]]
    %v1408 = vstv %s1407
    %v1409 = vmul.f32 %v1408, %v72
    %v1410 = vmul.f32 %v1408, %v73
    %v1411 = vmul.f32 %v1408, 0.0
    %1415 = vrot.lane.b32.xlu0 %v1409, 80
    %v1416 = vpop.permute.xlu0 %1415
    %1417 = vrot.lane.b32.xlu0 %v1410, 80
    %v1418 = vpop.permute.xlu0 %1417
    %1419 = vrot.lane.b32.xlu0 %v1411, 80
    %v1420 = vpop.permute.xlu0 %1419
    %v1421 = vsel %vm200, %v1416, %v1418
    %v1422 = vsel %vm200, %v1418, %v1420
    %v1426 = vadd.f32 %v1404, %v1416
    %v1427 = vadd.f32 %v1405, %v1421
    %v1428 = vadd.f32 %v1406, %v1422
    %s1429 = sld [smem:[#allocation3 + $0x4a]]
    %v1430 = vstv %s1429
    %v1431 = vmul.f32 %v1430, %v76
    %v1432 = vmul.f32 %v1430, %v77
    %v1433 = vmul.f32 %v1430, 0.0
    %1437 = vrot.lane.b32.xlu0 %v1431, 80
    %v1438 = vpop.permute.xlu0 %1437
    %1439 = vrot.lane.b32.xlu0 %v1432, 80
    %v1440 = vpop.permute.xlu0 %1439
    %1441 = vrot.lane.b32.xlu0 %v1433, 80
    %v1442 = vpop.permute.xlu0 %1441
    %v1443 = vsel %vm200, %v1438, %v1440
    %v1444 = vsel %vm200, %v1440, %v1442
    %v1448 = vadd.f32 %v1426, %v1438
    %v1449 = vadd.f32 %v1427, %v1443
    %v1450 = vadd.f32 %v1428, %v1444
    %s1451 = sld [smem:[#allocation3 + $0x20]]
    %v1452 = vstv %s1451
    %v1453 = vmul.f32 %v1452, %v72
    %v1454 = vmul.f32 %v1452, %v73
    %v1455 = vmul.f32 %v1452, 0.0
    %1459 = vrot.lane.b32.xlu0 %v1453, 64
    %v1460 = vpop.permute.xlu0 %1459
    %1461 = vrot.lane.b32.xlu0 %v1454, 64
    %v1462 = vpop.permute.xlu0 %1461
    %1463 = vrot.lane.b32.xlu0 %v1455, 64
    %v1464 = vpop.permute.xlu0 %1463
    %v1465 = vsel %vm245, %v1460, %v1462
    %v1466 = vsel %vm245, %v1462, %v1464
    %v1470 = vadd.f32 %v1448, %v1460
    %v1471 = vadd.f32 %v1449, %v1465
    %v1472 = vadd.f32 %v1450, %v1466
    %s1473 = sld [smem:[#allocation3 + $0x51]]
    %v1474 = vstv %s1473
    %v1475 = vmul.f32 %v1474, %v76
    %v1476 = vmul.f32 %v1474, %v77
    %v1477 = vmul.f32 %v1474, 0.0
    %1481 = vrot.lane.b32.xlu0 %v1475, 64
    %v1482 = vpop.permute.xlu0 %1481
    %1483 = vrot.lane.b32.xlu0 %v1476, 64
    %v1484 = vpop.permute.xlu0 %1483
    %1485 = vrot.lane.b32.xlu0 %v1477, 64
    %v1486 = vpop.permute.xlu0 %1485
    %v1487 = vsel %vm245, %v1482, %v1484
    %v1488 = vsel %vm245, %v1484, %v1486
    %v1492 = vadd.f32 %v1470, %v1482
    %v1493 = vadd.f32 %v1471, %v1487
    %v1494 = vadd.f32 %v1472, %v1488
    %s1495 = sld [smem:[#allocation3 + $0x27]]
    %v1496 = vstv %s1495
    %v1497 = vmul.f32 %v1496, %v72
    %v1498 = vmul.f32 %v1496, %v73
    %v1499 = vmul.f32 %v1496, 0.0
    %1503 = vrot.lane.b32.xlu0 %v1497, 48
    %v1504 = vpop.permute.xlu0 %1503
    %1505 = vrot.lane.b32.xlu0 %v1498, 48
    %v1506 = vpop.permute.xlu0 %1505
    %1507 = vrot.lane.b32.xlu0 %v1499, 48
    %v1508 = vpop.permute.xlu0 %1507
    %v1509 = vsel %vm290, %v1504, %v1506
    %v1510 = vsel %vm290, %v1506, %v1508
    %v1514 = vadd.f32 %v1492, %v1504
    %v1515 = vadd.f32 %v1493, %v1509
    %v1516 = vadd.f32 %v1494, %v1510
    %s1517 = sld [smem:[#allocation3 + $0x58]]
    %v1518 = vstv %s1517
    %v1519 = vmul.f32 %v1518, %v76
    %v1520 = vmul.f32 %v1518, %v77
    %v1521 = vmul.f32 %v1518, 0.0
    %1525 = vrot.lane.b32.xlu0 %v1519, 48
    %v1526 = vpop.permute.xlu0 %1525
    %1527 = vrot.lane.b32.xlu0 %v1520, 48
    %v1528 = vpop.permute.xlu0 %1527
    %1529 = vrot.lane.b32.xlu0 %v1521, 48
    %v1530 = vpop.permute.xlu0 %1529
    %v1531 = vsel %vm290, %v1526, %v1528
    %v1532 = vsel %vm290, %v1528, %v1530
    %v1536 = vadd.f32 %v1514, %v1526
    %v1537 = vadd.f32 %v1515, %v1531
    %v1538 = vadd.f32 %v1516, %v1532
    %s1539 = sld [smem:[#allocation3 + $0x2e]]
    %v1540 = vstv %s1539
    %v1541 = vmul.f32 %v1540, %v72
    %v1542 = vmul.f32 %v1540, %v73
    %v1543 = vmul.f32 %v1540, 0.0
    %1547 = vrot.lane.b32.xlu0 %v1541, 32
    %v1548 = vpop.permute.xlu0 %1547
    %1549 = vrot.lane.b32.xlu0 %v1542, 32
    %v1550 = vpop.permute.xlu0 %1549
    %1551 = vrot.lane.b32.xlu0 %v1543, 32
    %v1552 = vpop.permute.xlu0 %1551
    %v1553 = vsel %vm335, %v1548, %v1550
    %v1554 = vsel %vm335, %v1550, %v1552
    %v1558 = vadd.f32 %v1536, %v1548
    %v1559 = vadd.f32 %v1537, %v1553
    %v1560 = vadd.f32 %v1538, %v1554
    %s1561 = sld [smem:[#allocation3 + $0x5f]]
    %v1562 = vstv %s1561
    %v1563 = vmul.f32 %v1562, %v76
    %v1564 = vmul.f32 %v1562, %v77
    %v1565 = vmul.f32 %v1562, 0.0
    %1569 = vrot.lane.b32.xlu0 %v1563, 32
    %v1570 = vpop.permute.xlu0 %1569
    %1571 = vrot.lane.b32.xlu0 %v1564, 32
    %v1572 = vpop.permute.xlu0 %1571
    %1573 = vrot.lane.b32.xlu0 %v1565, 32
    %v1574 = vpop.permute.xlu0 %1573
    %v1575 = vsel %vm335, %v1570, %v1572
    %v1576 = vsel %vm335, %v1572, %v1574
    %v1580 = vadd.f32 %v1558, %v1570
    %v1581 = vadd.f32 %v1559, %v1575
    %v1582 = vadd.f32 %v1560, %v1576
    %s1583 = scalar_lea.vmem [#allocation7], 4
    %v1584 = vld [vmem:[%s1583] ss:$8 sm:$0x3]
    %v1586 = vlaneseq
    %v1587 = vshrl.u32 %v1586, 7
    %v1588 = vsub.s32 0, %v1587
    %v1589 = vrot.slane %v1584, %v1588
    %v1590 = vlaneseq
    %v1591 = vshrl.u32 %v1590, 7
    %v1592 = vsub.s32 1, %v1591
    %v1593 = vrot.slane %v1584, %v1592
    %1599 = vrot.lane.b32.xlu0 %v1580, 47
    %v1600 = vpop.permute.xlu0 %1599
    %1601 = vrot.lane.b32.xlu0 %v1581, 47
    %v1602 = vpop.permute.xlu0 %1601
    %1603 = vrot.lane.b32.xlu0 %v1582, 47
    %v1604 = vpop.permute.xlu0 %1603
    %vm1605 = vcmask 384000
    %v1606 = vsel %vm1605, %v1600, %v1602
    %v1607 = vsel %vm1605, %v1602, %v1604
    %v1610 = vmul.f32 %v1589, %v1606
    %v1611 = vmul.f32 %v1593, %v1607
    %v1612 = vadd.f32 %v1301, %v1610
    %v1613 = vadd.f32 %v1302, %v1611
    %s1614 = sld [smem:[#allocation3 + $0x5]]
    %v1615 = vstv %s1614
    %v1616 = vmul.f32 %v1615, 0.0
    %v1617 = vmul.f32 %v1615, %v72
    %v1618 = vmul.f32 %v1615, %v73
    %v1619 = vadd.f32 %v1616, 0.0
    %v1620 = vadd.f32 %v1617, 0.0
    %v1621 = vadd.f32 %v1618, 0.0
    %s1622 = sld [smem:[#allocation3 + $0x36]]
    %v1623 = vstv %s1622
    %v1624 = vmul.f32 %v1623, 0.0
    %v1625 = vmul.f32 %v1623, %v76
    %v1626 = vmul.f32 %v1623, %v77
    %v1627 = vadd.f32 %v1619, %v1624
    %v1628 = vadd.f32 %v1620, %v1625
    %v1629 = vadd.f32 %v1621, %v1626
    %s1630 = sld [smem:[#allocation3 + $0xc]]
    %v1631 = vstv %s1630
    %v1632 = vmul.f32 %v1631, 0.0
    %v1633 = vmul.f32 %v1631, %v72
    %v1634 = vmul.f32 %v1631, %v73
    %1638 = vrot.lane.b32.xlu0 %v1632, 112
    %v1639 = vpop.permute.xlu0 %1638
    %1640 = vrot.lane.b32.xlu0 %v1633, 112
    %v1641 = vpop.permute.xlu0 %1640
    %1642 = vrot.lane.b32.xlu0 %v1634, 112
    %v1643 = vpop.permute.xlu0 %1642
    %v1644 = vsel %vm110, %v1639, %v1641
    %v1645 = vsel %vm110, %v1641, %v1643
    %v1649 = vadd.f32 %v1627, %v1644
    %v1650 = vadd.f32 %v1628, %v1645
    %v1651 = vadd.f32 %v1629, %v1643
    %s1652 = sld [smem:[#allocation3 + $0x3d]]
    %v1653 = vstv %s1652
    %v1654 = vmul.f32 %v1653, 0.0
    %v1655 = vmul.f32 %v1653, %v76
    %v1656 = vmul.f32 %v1653, %v77
    %1660 = vrot.lane.b32.xlu0 %v1654, 112
    %v1661 = vpop.permute.xlu0 %1660
    %1662 = vrot.lane.b32.xlu0 %v1655, 112
    %v1663 = vpop.permute.xlu0 %1662
    %1664 = vrot.lane.b32.xlu0 %v1656, 112
    %v1665 = vpop.permute.xlu0 %1664
    %v1666 = vsel %vm110, %v1661, %v1663
    %v1667 = vsel %vm110, %v1663, %v1665
    %v1671 = vadd.f32 %v1649, %v1666
    %v1672 = vadd.f32 %v1650, %v1667
    %v1673 = vadd.f32 %v1651, %v1665
    %s1674 = sld [smem:[#allocation3 + $0x13]]
    %v1675 = vstv %s1674
    %v1676 = vmul.f32 %v1675, 0.0
    %v1677 = vmul.f32 %v1675, %v72
    %v1678 = vmul.f32 %v1675, %v73
    %1682 = vrot.lane.b32.xlu0 %v1676, 96
    %v1683 = vpop.permute.xlu0 %1682
    %1684 = vrot.lane.b32.xlu0 %v1677, 96
    %v1685 = vpop.permute.xlu0 %1684
    %1686 = vrot.lane.b32.xlu0 %v1678, 96
    %v1687 = vpop.permute.xlu0 %1686
    %v1688 = vsel %vm155, %v1683, %v1685
    %v1689 = vsel %vm155, %v1685, %v1687
    %v1693 = vadd.f32 %v1671, %v1688
    %v1694 = vadd.f32 %v1672, %v1689
    %v1695 = vadd.f32 %v1673, %v1687
    %s1696 = sld [smem:[#allocation3 + $0x44]]
    %v1697 = vstv %s1696
    %v1698 = vmul.f32 %v1697, 0.0
    %v1699 = vmul.f32 %v1697, %v76
    %v1700 = vmul.f32 %v1697, %v77
    %1704 = vrot.lane.b32.xlu0 %v1698, 96
    %v1705 = vpop.permute.xlu0 %1704
    %1706 = vrot.lane.b32.xlu0 %v1699, 96
    %v1707 = vpop.permute.xlu0 %1706
    %1708 = vrot.lane.b32.xlu0 %v1700, 96
    %v1709 = vpop.permute.xlu0 %1708
    %v1710 = vsel %vm155, %v1705, %v1707
    %v1711 = vsel %vm155, %v1707, %v1709
    %v1715 = vadd.f32 %v1693, %v1710
    %v1716 = vadd.f32 %v1694, %v1711
    %v1717 = vadd.f32 %v1695, %v1709
    %s1718 = sld [smem:[#allocation3 + $0x1a]]
    %v1719 = vstv %s1718
    %v1720 = vmul.f32 %v1719, %v72
    %v1721 = vmul.f32 %v1719, %v73
    %v1722 = vmul.f32 %v1719, 0.0
    %1726 = vrot.lane.b32.xlu0 %v1720, 80
    %v1727 = vpop.permute.xlu0 %1726
    %1728 = vrot.lane.b32.xlu0 %v1721, 80
    %v1729 = vpop.permute.xlu0 %1728
    %1730 = vrot.lane.b32.xlu0 %v1722, 80
    %v1731 = vpop.permute.xlu0 %1730
    %v1732 = vsel %vm200, %v1727, %v1729
    %v1733 = vsel %vm200, %v1729, %v1731
    %v1737 = vadd.f32 %v1715, %v1727
    %v1738 = vadd.f32 %v1716, %v1732
    %v1739 = vadd.f32 %v1717, %v1733
    %s1740 = sld [smem:[#allocation3 + $0x4b]]
    %v1741 = vstv %s1740
    %v1742 = vmul.f32 %v1741, %v76
    %v1743 = vmul.f32 %v1741, %v77
    %v1744 = vmul.f32 %v1741, 0.0
    %1748 = vrot.lane.b32.xlu0 %v1742, 80
    %v1749 = vpop.permute.xlu0 %1748
    %1750 = vrot.lane.b32.xlu0 %v1743, 80
    %v1751 = vpop.permute.xlu0 %1750
    %1752 = vrot.lane.b32.xlu0 %v1744, 80
    %v1753 = vpop.permute.xlu0 %1752
    %v1754 = vsel %vm200, %v1749, %v1751
    %v1755 = vsel %vm200, %v1751, %v1753
    %v1759 = vadd.f32 %v1737, %v1749
    %v1760 = vadd.f32 %v1738, %v1754
    %v1761 = vadd.f32 %v1739, %v1755
    %s1762 = sld [smem:[#allocation3 + $0x21]]
    %v1763 = vstv %s1762
    %v1764 = vmul.f32 %v1763, %v72
    %v1765 = vmul.f32 %v1763, %v73
    %v1766 = vmul.f32 %v1763, 0.0
    %1770 = vrot.lane.b32.xlu0 %v1764, 64
    %v1771 = vpop.permute.xlu0 %1770
    %1772 = vrot.lane.b32.xlu0 %v1765, 64
    %v1773 = vpop.permute.xlu0 %1772
    %1774 = vrot.lane.b32.xlu0 %v1766, 64
    %v1775 = vpop.permute.xlu0 %1774
    %v1776 = vsel %vm245, %v1771, %v1773
    %v1777 = vsel %vm245, %v1773, %v1775
    %v1781 = vadd.f32 %v1759, %v1771
    %v1782 = vadd.f32 %v1760, %v1776
    %v1783 = vadd.f32 %v1761, %v1777
    %s1784 = sld [smem:[#allocation3 + $0x52]]
    %v1785 = vstv %s1784
    %v1786 = vmul.f32 %v1785, %v76
    %v1787 = vmul.f32 %v1785, %v77
    %v1788 = vmul.f32 %v1785, 0.0
    %1792 = vrot.lane.b32.xlu0 %v1786, 64
    %v1793 = vpop.permute.xlu0 %1792
    %1794 = vrot.lane.b32.xlu0 %v1787, 64
    %v1795 = vpop.permute.xlu0 %1794
    %1796 = vrot.lane.b32.xlu0 %v1788, 64
    %v1797 = vpop.permute.xlu0 %1796
    %v1798 = vsel %vm245, %v1793, %v1795
    %v1799 = vsel %vm245, %v1795, %v1797
    %v1803 = vadd.f32 %v1781, %v1793
    %v1804 = vadd.f32 %v1782, %v1798
    %v1805 = vadd.f32 %v1783, %v1799
    %s1806 = sld [smem:[#allocation3 + $0x28]]
    %v1807 = vstv %s1806
    %v1808 = vmul.f32 %v1807, %v72
    %v1809 = vmul.f32 %v1807, %v73
    %v1810 = vmul.f32 %v1807, 0.0
    %1814 = vrot.lane.b32.xlu0 %v1808, 48
    %v1815 = vpop.permute.xlu0 %1814
    %1816 = vrot.lane.b32.xlu0 %v1809, 48
    %v1817 = vpop.permute.xlu0 %1816
    %1818 = vrot.lane.b32.xlu0 %v1810, 48
    %v1819 = vpop.permute.xlu0 %1818
    %v1820 = vsel %vm290, %v1815, %v1817
    %v1821 = vsel %vm290, %v1817, %v1819
    %v1825 = vadd.f32 %v1803, %v1815
    %v1826 = vadd.f32 %v1804, %v1820
    %v1827 = vadd.f32 %v1805, %v1821
    %s1828 = sld [smem:[#allocation3 + $0x59]]
    %v1829 = vstv %s1828
    %v1830 = vmul.f32 %v1829, %v76
    %v1831 = vmul.f32 %v1829, %v77
    %v1832 = vmul.f32 %v1829, 0.0
    %1836 = vrot.lane.b32.xlu0 %v1830, 48
    %v1837 = vpop.permute.xlu0 %1836
    %1838 = vrot.lane.b32.xlu0 %v1831, 48
    %v1839 = vpop.permute.xlu0 %1838
    %1840 = vrot.lane.b32.xlu0 %v1832, 48
    %v1841 = vpop.permute.xlu0 %1840
    %v1842 = vsel %vm290, %v1837, %v1839
    %v1843 = vsel %vm290, %v1839, %v1841
    %v1847 = vadd.f32 %v1825, %v1837
    %v1848 = vadd.f32 %v1826, %v1842
    %v1849 = vadd.f32 %v1827, %v1843
    %s1850 = sld [smem:[#allocation3 + $0x2f]]
    %v1851 = vstv %s1850
    %v1852 = vmul.f32 %v1851, %v72
    %v1853 = vmul.f32 %v1851, %v73
    %v1854 = vmul.f32 %v1851, 0.0
    %1858 = vrot.lane.b32.xlu0 %v1852, 32
    %v1859 = vpop.permute.xlu0 %1858
    %1860 = vrot.lane.b32.xlu0 %v1853, 32
    %v1861 = vpop.permute.xlu0 %1860
    %1862 = vrot.lane.b32.xlu0 %v1854, 32
    %v1863 = vpop.permute.xlu0 %1862
    %v1864 = vsel %vm335, %v1859, %v1861
    %v1865 = vsel %vm335, %v1861, %v1863
    %v1869 = vadd.f32 %v1847, %v1859
    %v1870 = vadd.f32 %v1848, %v1864
    %v1871 = vadd.f32 %v1849, %v1865
    %s1872 = sld [smem:[#allocation3 + $0x60]]
    %v1873 = vstv %s1872
    %v1874 = vmul.f32 %v1873, %v76
    %v1875 = vmul.f32 %v1873, %v77
    %v1876 = vmul.f32 %v1873, 0.0
    %1880 = vrot.lane.b32.xlu0 %v1874, 32
    %v1881 = vpop.permute.xlu0 %1880
    %1882 = vrot.lane.b32.xlu0 %v1875, 32
    %v1883 = vpop.permute.xlu0 %1882
    %1884 = vrot.lane.b32.xlu0 %v1876, 32
    %v1885 = vpop.permute.xlu0 %1884
    %v1886 = vsel %vm335, %v1881, %v1883
    %v1887 = vsel %vm335, %v1883, %v1885
    %v1891 = vadd.f32 %v1869, %v1881
    %v1892 = vadd.f32 %v1870, %v1886
    %v1893 = vadd.f32 %v1871, %v1887
    %s1894 = scalar_lea.vmem [#allocation7], 5
    %v1895 = vld [vmem:[%s1894] ss:$8 sm:$0x3]
    %v1897 = vlaneseq
    %v1898 = vshrl.u32 %v1897, 7
    %v1899 = vsub.s32 0, %v1898
    %v1900 = vrot.slane %v1895, %v1899
    %v1901 = vlaneseq
    %v1902 = vshrl.u32 %v1901, 7
    %v1903 = vsub.s32 1, %v1902
    %v1904 = vrot.slane %v1895, %v1903
    %1910 = vrot.lane.b32.xlu0 %v1891, 46
    %v1911 = vpop.permute.xlu0 %1910
    %1912 = vrot.lane.b32.xlu0 %v1892, 46
    %v1913 = vpop.permute.xlu0 %1912
    %1914 = vrot.lane.b32.xlu0 %v1893, 46
    %v1915 = vpop.permute.xlu0 %1914
    %vm1916 = vcmask 375808
    %v1917 = vsel %vm1916, %v1911, %v1913
    %v1918 = vsel %vm1916, %v1913, %v1915
    %v1921 = vmul.f32 %v1900, %v1917
    %v1922 = vmul.f32 %v1904, %v1918
    %v1923 = vadd.f32 %v1612, %v1921
    %v1924 = vadd.f32 %v1613, %v1922
    %s1925 = sld [smem:[#allocation3 + $0x6]]
    %v1926 = vstv %s1925
    %v1927 = vmul.f32 %v1926, 0.0
    %v1928 = vmul.f32 %v1926, %v72
    %v1929 = vmul.f32 %v1926, %v73
    %v1930 = vadd.f32 %v1927, 0.0
    %v1931 = vadd.f32 %v1928, 0.0
    %v1932 = vadd.f32 %v1929, 0.0
    %s1933 = sld [smem:[#allocation3 + $0x37]]
    %v1934 = vstv %s1933
    %v1935 = vmul.f32 %v1934, 0.0
    %v1936 = vmul.f32 %v1934, %v76
    %v1937 = vmul.f32 %v1934, %v77
    %v1938 = vadd.f32 %v1930, %v1935
    %v1939 = vadd.f32 %v1931, %v1936
    %v1940 = vadd.f32 %v1932, %v1937
    %s1941 = sld [smem:[#allocation3 + $0xd]]
    %v1942 = vstv %s1941
    %v1943 = vmul.f32 %v1942, 0.0
    %v1944 = vmul.f32 %v1942, %v72
    %v1945 = vmul.f32 %v1942, %v73
    %1949 = vrot.lane.b32.xlu0 %v1943, 112
    %v1950 = vpop.permute.xlu0 %1949
    %1951 = vrot.lane.b32.xlu0 %v1944, 112
    %v1952 = vpop.permute.xlu0 %1951
    %1953 = vrot.lane.b32.xlu0 %v1945, 112
    %v1954 = vpop.permute.xlu0 %1953
    %v1955 = vsel %vm110, %v1950, %v1952
    %v1956 = vsel %vm110, %v1952, %v1954
    %v1960 = vadd.f32 %v1938, %v1955
    %v1961 = vadd.f32 %v1939, %v1956
    %v1962 = vadd.f32 %v1940, %v1954
    %s1963 = sld [smem:[#allocation3 + $0x3e]]
    %v1964 = vstv %s1963
    %v1965 = vmul.f32 %v1964, 0.0
    %v1966 = vmul.f32 %v1964, %v76
    %v1967 = vmul.f32 %v1964, %v77
    %1971 = vrot.lane.b32.xlu0 %v1965, 112
    %v1972 = vpop.permute.xlu0 %1971
    %1973 = vrot.lane.b32.xlu0 %v1966, 112
    %v1974 = vpop.permute.xlu0 %1973
    %1975 = vrot.lane.b32.xlu0 %v1967, 112
    %v1976 = vpop.permute.xlu0 %1975
    %v1977 = vsel %vm110, %v1972, %v1974
    %v1978 = vsel %vm110, %v1974, %v1976
    %v1982 = vadd.f32 %v1960, %v1977
    %v1983 = vadd.f32 %v1961, %v1978
    %v1984 = vadd.f32 %v1962, %v1976
    %s1985 = sld [smem:[#allocation3 + $0x14]]
    %v1986 = vstv %s1985
    %v1987 = vmul.f32 %v1986, 0.0
    %v1988 = vmul.f32 %v1986, %v72
    %v1989 = vmul.f32 %v1986, %v73
    %1993 = vrot.lane.b32.xlu0 %v1987, 96
    %v1994 = vpop.permute.xlu0 %1993
    %1995 = vrot.lane.b32.xlu0 %v1988, 96
    %v1996 = vpop.permute.xlu0 %1995
    %1997 = vrot.lane.b32.xlu0 %v1989, 96
    %v1998 = vpop.permute.xlu0 %1997
    %v1999 = vsel %vm155, %v1994, %v1996
    %v2000 = vsel %vm155, %v1996, %v1998
    %v2004 = vadd.f32 %v1982, %v1999
    %v2005 = vadd.f32 %v1983, %v2000
    %v2006 = vadd.f32 %v1984, %v1998
    %s2007 = sld [smem:[#allocation3 + $0x45]]
    %v2008 = vstv %s2007
    %v2009 = vmul.f32 %v2008, 0.0
    %v2010 = vmul.f32 %v2008, %v76
    %v2011 = vmul.f32 %v2008, %v77
    %2015 = vrot.lane.b32.xlu0 %v2009, 96
    %v2016 = vpop.permute.xlu0 %2015
    %2017 = vrot.lane.b32.xlu0 %v2010, 96
    %v2018 = vpop.permute.xlu0 %2017
    %2019 = vrot.lane.b32.xlu0 %v2011, 96
    %v2020 = vpop.permute.xlu0 %2019
    %v2021 = vsel %vm155, %v2016, %v2018
    %v2022 = vsel %vm155, %v2018, %v2020
    %v2026 = vadd.f32 %v2004, %v2021
    %v2027 = vadd.f32 %v2005, %v2022
    %v2028 = vadd.f32 %v2006, %v2020
    %s2029 = sld [smem:[#allocation3 + $0x1b]]
    %v2030 = vstv %s2029
    %v2031 = vmul.f32 %v2030, %v72
    %v2032 = vmul.f32 %v2030, %v73
    %v2033 = vmul.f32 %v2030, 0.0
    %2037 = vrot.lane.b32.xlu0 %v2031, 80
    %v2038 = vpop.permute.xlu0 %2037
    %2039 = vrot.lane.b32.xlu0 %v2032, 80
    %v2040 = vpop.permute.xlu0 %2039
    %2041 = vrot.lane.b32.xlu0 %v2033, 80
    %v2042 = vpop.permute.xlu0 %2041
    %v2043 = vsel %vm200, %v2038, %v2040
    %v2044 = vsel %vm200, %v2040, %v2042
    %v2048 = vadd.f32 %v2026, %v2038
    %v2049 = vadd.f32 %v2027, %v2043
    %v2050 = vadd.f32 %v2028, %v2044
    %s2051 = sld [smem:[#allocation3 + $0x4c]]
    %v2052 = vstv %s2051
    %v2053 = vmul.f32 %v2052, %v76
    %v2054 = vmul.f32 %v2052, %v77
    %v2055 = vmul.f32 %v2052, 0.0
    %2059 = vrot.lane.b32.xlu0 %v2053, 80
    %v2060 = vpop.permute.xlu0 %2059
    %2061 = vrot.lane.b32.xlu0 %v2054, 80
    %v2062 = vpop.permute.xlu0 %2061
    %2063 = vrot.lane.b32.xlu0 %v2055, 80
    %v2064 = vpop.permute.xlu0 %2063
    %v2065 = vsel %vm200, %v2060, %v2062
    %v2066 = vsel %vm200, %v2062, %v2064
    %v2070 = vadd.f32 %v2048, %v2060
    %v2071 = vadd.f32 %v2049, %v2065
    %v2072 = vadd.f32 %v2050, %v2066
    %s2073 = sld [smem:[#allocation3 + $0x22]]
    %v2074 = vstv %s2073
    %v2075 = vmul.f32 %v2074, %v72
    %v2076 = vmul.f32 %v2074, %v73
    %v2077 = vmul.f32 %v2074, 0.0
    %2081 = vrot.lane.b32.xlu0 %v2075, 64
    %v2082 = vpop.permute.xlu0 %2081
    %2083 = vrot.lane.b32.xlu0 %v2076, 64
    %v2084 = vpop.permute.xlu0 %2083
    %2085 = vrot.lane.b32.xlu0 %v2077, 64
    %v2086 = vpop.permute.xlu0 %2085
    %v2087 = vsel %vm245, %v2082, %v2084
    %v2088 = vsel %vm245, %v2084, %v2086
    %v2092 = vadd.f32 %v2070, %v2082
    %v2093 = vadd.f32 %v2071, %v2087
    %v2094 = vadd.f32 %v2072, %v2088
    %s2095 = sld [smem:[#allocation3 + $0x53]]
    %v2096 = vstv %s2095
    %v2097 = vmul.f32 %v2096, %v76
    %v2098 = vmul.f32 %v2096, %v77
    %v2099 = vmul.f32 %v2096, 0.0
    %2103 = vrot.lane.b32.xlu0 %v2097, 64
    %v2104 = vpop.permute.xlu0 %2103
    %2105 = vrot.lane.b32.xlu0 %v2098, 64
    %v2106 = vpop.permute.xlu0 %2105
    %2107 = vrot.lane.b32.xlu0 %v2099, 64
    %v2108 = vpop.permute.xlu0 %2107
    %v2109 = vsel %vm245, %v2104, %v2106
    %v2110 = vsel %vm245, %v2106, %v2108
    %v2114 = vadd.f32 %v2092, %v2104
    %v2115 = vadd.f32 %v2093, %v2109
    %v2116 = vadd.f32 %v2094, %v2110
    %s2117 = sld [smem:[#allocation3 + $0x29]]
    %v2118 = vstv %s2117
    %v2119 = vmul.f32 %v2118, %v72
    %v2120 = vmul.f32 %v2118, %v73
    %v2121 = vmul.f32 %v2118, 0.0
    %2125 = vrot.lane.b32.xlu0 %v2119, 48
    %v2126 = vpop.permute.xlu0 %2125
    %2127 = vrot.lane.b32.xlu0 %v2120, 48
    %v2128 = vpop.permute.xlu0 %2127
    %2129 = vrot.lane.b32.xlu0 %v2121, 48
    %v2130 = vpop.permute.xlu0 %2129
    %v2131 = vsel %vm290, %v2126, %v2128
    %v2132 = vsel %vm290, %v2128, %v2130
    %v2136 = vadd.f32 %v2114, %v2126
    %v2137 = vadd.f32 %v2115, %v2131
    %v2138 = vadd.f32 %v2116, %v2132
    %s2139 = sld [smem:[#allocation3 + $0x5a]]
    %v2140 = vstv %s2139
    %v2141 = vmul.f32 %v2140, %v76
    %v2142 = vmul.f32 %v2140, %v77
    %v2143 = vmul.f32 %v2140, 0.0
    %2147 = vrot.lane.b32.xlu0 %v2141, 48
    %v2148 = vpop.permute.xlu0 %2147
    %2149 = vrot.lane.b32.xlu0 %v2142, 48
    %v2150 = vpop.permute.xlu0 %2149
    %2151 = vrot.lane.b32.xlu0 %v2143, 48
    %v2152 = vpop.permute.xlu0 %2151
    %v2153 = vsel %vm290, %v2148, %v2150
    %v2154 = vsel %vm290, %v2150, %v2152
    %v2158 = vadd.f32 %v2136, %v2148
    %v2159 = vadd.f32 %v2137, %v2153
    %v2160 = vadd.f32 %v2138, %v2154
    %s2161 = sld [smem:[#allocation3 + $0x30]]
    %v2162 = vstv %s2161
    %v2163 = vmul.f32 %v2162, %v72
    %v2164 = vmul.f32 %v2162, %v73
    %v2165 = vmul.f32 %v2162, 0.0
    %2169 = vrot.lane.b32.xlu0 %v2163, 32
    %v2170 = vpop.permute.xlu0 %2169
    %2171 = vrot.lane.b32.xlu0 %v2164, 32
    %v2172 = vpop.permute.xlu0 %2171
    %2173 = vrot.lane.b32.xlu0 %v2165, 32
    %v2174 = vpop.permute.xlu0 %2173
    %v2175 = vsel %vm335, %v2170, %v2172
    %v2176 = vsel %vm335, %v2172, %v2174
    %v2180 = vadd.f32 %v2158, %v2170
    %v2181 = vadd.f32 %v2159, %v2175
    %v2182 = vadd.f32 %v2160, %v2176
    %s2183 = sld [smem:[#allocation3 + $0x61]]
    %v2184 = vstv %s2183
    %v2185 = vmul.f32 %v2184, %v76
    %v2186 = vmul.f32 %v2184, %v77
    %v2187 = vmul.f32 %v2184, 0.0
    %2191 = vrot.lane.b32.xlu0 %v2185, 32
    %v2192 = vpop.permute.xlu0 %2191
    %2193 = vrot.lane.b32.xlu0 %v2186, 32
    %v2194 = vpop.permute.xlu0 %2193
    %2195 = vrot.lane.b32.xlu0 %v2187, 32
    %v2196 = vpop.permute.xlu0 %2195
    %v2197 = vsel %vm335, %v2192, %v2194
    %v2198 = vsel %vm335, %v2194, %v2196
    %v2202 = vadd.f32 %v2180, %v2192
    %v2203 = vadd.f32 %v2181, %v2197
    %v2204 = vadd.f32 %v2182, %v2198
    %s2205 = scalar_lea.vmem [#allocation7], 6
    %v2206 = vld [vmem:[%s2205] ss:$8 sm:$0x3]
    %v2208 = vlaneseq
    %v2209 = vshrl.u32 %v2208, 7
    %v2210 = vsub.s32 0, %v2209
    %v2211 = vrot.slane %v2206, %v2210
    %v2212 = vlaneseq
    %v2213 = vshrl.u32 %v2212, 7
    %v2214 = vsub.s32 1, %v2213
    %v2215 = vrot.slane %v2206, %v2214
    %2221 = vrot.lane.b32.xlu0 %v2202, 45
    %v2222 = vpop.permute.xlu0 %2221
    %2223 = vrot.lane.b32.xlu0 %v2203, 45
    %v2224 = vpop.permute.xlu0 %2223
    %2225 = vrot.lane.b32.xlu0 %v2204, 45
    %v2226 = vpop.permute.xlu0 %2225
    %vm2227 = vcmask 367616
    %v2228 = vsel %vm2227, %v2222, %v2224
    %v2229 = vsel %vm2227, %v2224, %v2226
    %v2232 = vmul.f32 %v2211, %v2228
    %v2233 = vmul.f32 %v2215, %v2229
    %v2234 = vadd.f32 %v1923, %v2232
    %v2235 = vadd.f32 %v1924, %v2233
    %v2236 = vsub.f32 0.0, %v2234
    %v2237 = vsub.f32 0.0, %v2235
    %v2238 = vmul.f32 %v2236, 1.442695
    %v2239 = vpow.pop %v2238
    %v2240 = vmul.f32 %v2237, 1.442695
    %v2241 = vpow.pop %v2240
    %v2242 = vadd.f32 %v2239, 1.0
    %v2243 = vadd.f32 %v2241, 1.0
    %v2244 = vrcp.pop %v2242
    %v2245 = vmul.f32 1.0, %v2244
    %v2246 = vrcp.pop %v2243
    %v2247 = vmul.f32 1.0, %v2246
    %v2248 = vmul.f32 %v56, %v2245
    %v2249 = vmul.f32 %v57, %v2247
    %2250 = vst [vmem:[#allocation10] sm:$0xff] %v2248
    %2251 = vst [vmem:[#allocation10 + $0x8] sm:$0xff] %v2249
    %v2252 = vld [vmem:[#allocation8 + $0x10] sm:$0xff]
    %v2253 = vld [vmem:[#allocation8 + $0x18] sm:$0xff]
    %v2254 = vmul.f32 %v2252, %v2245
    %v2255 = vmul.f32 %v2253, %v2247
    %2256 = vst [vmem:[#allocation10 + $0x10] sm:$0xff] %v2254
    %2257 = vst [vmem:[#allocation10 + $0x18] sm:$0xff] %v2255
    %v2258 = vld [vmem:[#allocation8 + $0x20] sm:$0xff]
    %v2259 = vld [vmem:[#allocation8 + $0x28] sm:$0xff]
    %v2260 = vmul.f32 %v2258, %v2245
    %v2261 = vmul.f32 %v2259, %v2247
    %2262 = vst [vmem:[#allocation10 + $0x20] sm:$0xff] %v2260
    %2263 = vst [vmem:[#allocation10 + $0x28] sm:$0xff] %v2261
    %v2264 = vld [vmem:[#allocation8 + $0x30] sm:$0xff]
    %v2265 = vld [vmem:[#allocation8 + $0x38] sm:$0xff]
    %v2266 = vmul.f32 %v2264, %v2245
    %v2267 = vmul.f32 %v2265, %v2247
    %2268 = vst [vmem:[#allocation10 + $0x30] sm:$0xff] %v2266
    %2269 = vst [vmem:[#allocation10 + $0x38] sm:$0xff] %v2267
    // Predicated region
    $region30: #{tpu_custom_call.1} parent=1 // pred_check
      _
    $region31: #{tpu_custom_call.1} parent=1 // pred_check_branch
      %2271 = sbr.rel (0) target = $region33
    $region32: #{tpu_custom_call.1} parent=1 // pred_region
      %s2273 = ssub.s32 1024, 1024
      %2274 = vsyncadd [#allocation5], %s2273
      %s2276 = sshll.u32 [#allocation10], 4
      %s2277 = int_to_ptr.vmem [resolvable:$true] %s2276
      %2279 = dma.vmem_to_hbm [thread:$0]  %s2277, 1024, %s4, [#allocation5]
    $region33: #{tpu_custom_call.1} parent=1 // pred_fallthru
      _
    // Predicated region
    $region34: #{tpu_custom_call.1} parent=1 // pred_check
      _
    $region35: #{tpu_custom_call.1} parent=1 // pred_check_branch
      %2281 = sbr.rel (0) target = $region37
    $region36: #{tpu_custom_call.1} parent=1 // pred_region
      %2282 = dma.done [#allocation5], 1024
    $region37: #{tpu_custom_call.1} parent=1 // pred_fallthru
      _
    %2283 = vsyncpa [#allocation4], 1
    %2284 = vsyncpa [#allocation9], 1
    %2285 = vsyncpa [#allocation5], 1
    %2286 = vsyncpa [#allocation6], 1

</llo_original>
